<compile_context>
chip_gen: v7x
topology: tpu7x:2x2x1
jax: 0.10.0
libtpu: 0.0.40
codegen_flags: <defaults>
</compile_context>

<pallas_src>
import jax
import jax.numpy as jnp
from jax.experimental import pallas as pl
from jax.experimental.pallas import tpu as pltpu


# ----------------------------------------------------------------------------
# Kernel
# ----------------------------------------------------------------------------
def _make_kernel(active_g: bool, act_dtype):
    def kernel(x_ref,
               w1, b1, w2, b2, w3, b3, w4, b4,          # RootBlock fc1..fc4
               we, be, wd, bd,                          # b_encoder / b_decoder (theta-padded)
               wbg, bbg,                                # backcast_g
               wf, bf,                                  # fused forecast (Wl@Wg, bl@Wg)
               out_ref):                                # concat(backcast, forecast)
        def dense_relu(h, w_ref, b_ref):
            out = jnp.dot(h, w_ref[...], preferred_element_type=jnp.float32)
            # Fused bias + ReLU + downcast: keeps inter-layer activations in act_dtype.
            return jnp.maximum(out + b_ref[...], 0.0).astype(act_dtype)

        # RootBlock trunk.
        h = dense_relu(x_ref[...], w1, b1)
        h = dense_relu(h, w2, b2)
        h = dense_relu(h, w3, b3)
        h = dense_relu(h, w4, b4)

        # Backcast autoencoder branch.
        bb = dense_relu(h, we, be)
        bb = dense_relu(bb, wd, bd)
        bb = jnp.dot(bb, wbg[...], preferred_element_type=jnp.float32) + bbg[...]

        # Forecast branch (fused linear).
        ff = jnp.dot(h, wf[...], preferred_element_type=jnp.float32) + bf[...]

        if active_g:
            bb = jnp.maximum(bb, 0.0)
            ff = jnp.maximum(ff, 0.0)

        # Single lane-dense store; wrapper splits into (backcast, forecast).
        out_ref[...] = jnp.concatenate([bb, ff], axis=-1).astype(out_ref.dtype)

    return kernel


# ----------------------------------------------------------------------------
# Helpers
# ----------------------------------------------------------------------------
def _round_up(n, m):
    return ((n + m - 1) // m) * m


def _choose_tile_b(batch, per_row_bytes, fixed_bytes, tile_b_max, vmem_budget_bytes):
    """Largest batch tile that fits the VMEM budget; keep >=2 grid steps (megacore)."""
    b_round = _round_up(batch, 8)
    avail = max(vmem_budget_bytes - fixed_bytes - (2 << 20), 1 << 20)
    t = int(avail // max(per_row_bytes, 1))
    t = min(t, int(tile_b_max), b_round)
    t = max(8, (t // 8) * 8)
    # v7x has 2 TensorCores: a 1-step grid cannot be sharded by "parallel" semantics.
    if pl.cdiv(b_round, t) < 2 and b_round >= 16:
        t = _round_up(pl.cdiv(b_round, 2), 8)
    return t


# ----------------------------------------------------------------------------
# Wrapper
# ----------------------------------------------------------------------------
def generic_ae_backcast_forward(x, params, *, active_g=False, tile_b=1024,
                                use_bf16_matmul=True, min_batch_for_pallas=256,
                                vmem_budget_bytes=24 << 20):
    """GenericAEBackcast forward. Returns (backcast, forecast)."""
    if x.ndim == 3 and x.shape[-1] == 1:          # tolerate (B, L, 1) inputs
        x = x[..., 0]
    x = x.astype(jnp.float32)

    B, L = x.shape
    units = params["fc1_w"].shape[1]
    thetas_dim = params["b_encoder_w"].shape[1]
    F = params["forecast_g_w"].shape[1]

    # For tiny batches the pallas_call/DMA fixed overhead dwarfs the compute.
    if B < min_batch_for_pallas:
        return _reference_forward(x, params, active_g=active_g,
                                  cast_bf16=use_bf16_matmul)

    w_dtype = jnp.bfloat16 if use_bf16_matmul else jnp.float32
    act_dtype = w_dtype
    elem_bytes = 2 if use_bf16_matmul else 4

    # ---- wrapper-side weight preparation -----------------------------------
    # (1) Algebraic fusion of the forecast branch (exact: no nonlinearity between
    #     forecast_linear and forecast_g).
    wf = jnp.dot(params["forecast_linear_w"], params["forecast_g_w"],
                 preferred_element_type=jnp.float32)                 # (units, F)
    bf = jnp.dot(params["forecast_linear_b"], params["forecast_g_w"],
                 preferred_element_type=jnp.float32)                 # (1, F)

    # (2) Zero-pad thetas_dim to a lane-friendly size (exact through ReLU).
    theta_pad = _round_up(max(thetas_dim, 1), 128)
    pad_t = theta_pad - thetas_dim
    we = jnp.pad(params["b_encoder_w"], ((0, 0), (0, pad_t)))
    be = jnp.pad(params["b_encoder_b"], ((0, 0), (0, pad_t)))
    wd = jnp.pad(params["b_decoder_w"], ((0, pad_t), (0, 0)))

    def W(a):
        return a.astype(w_dtype)

    # ---- tiling / VMEM accounting -------------------------------------------
    out_w = L + F
    weight_elems = (L * units + 3 * units * units + units * theta_pad
                    + theta_pad * units + units * L + units * F)
    weight_bytes = elem_bytes * weight_elems
    bias_bytes = 4 * (4 * units + theta_pad + units + L + F)
    per_row_bytes = (2 * L * elem_bytes            # x tile, double-buffered
                     + 2 * out_w * 4               # combined output tile, f32, double-buffered
                     + 6 * max(units, theta_pad, out_w) * 4)   # activation working set

    tile_b = _choose_tile_b(B, per_row_bytes, weight_bytes + bias_bytes,
                            tile_b, vmem_budget_bytes)
    B_pad = _round_up(B, tile_b)
    if B_pad != B:
        x = jnp.pad(x, ((0, B_pad - B), (0, 0)))
    x = x.astype(act_dtype)                        # halve the per-step x DMA on bf16 path

    operands = (
        x,
        W(params["fc1_w"]), params["fc1_b"],
        W(params["fc2_w"]), params["fc2_b"],
        W(params["fc3_w"]), params["fc3_b"],
        W(params["fc4_w"]), params["fc4_b"],
        W(we), be,
        W(wd), params["b_decoder_b"],
        W(params["backcast_g_w"]), params["backcast_g_b"],
        W(wf), bf,
    )

    grid = (B_pad // tile_b,)
    kernel = _make_kernel(bool(active_g), act_dtype)

    est_vmem = weight_bytes + bias_bytes + tile_b * per_row_bytes
    vmem_limit = int(min(64 << 20, max(32 << 20, int(est_vmem * 1.5) + (4 << 20))))

    flops = 2 * B_pad * weight_elems
    bytes_accessed = (B_pad * L * elem_bytes + weight_bytes + bias_bytes
                      + B_pad * out_w * 4)
    cost = pl.CostEstimate(flops=flops, transcendentals=0,
                           bytes_accessed=bytes_accessed)

    x_spec = pl.BlockSpec((tile_b, L), lambda i: (i, 0))
    out_spec = pl.BlockSpec((tile_b, out_w), lambda i: (i, 0))
    out_shape = jax.ShapeDtypeStruct((B_pad, out_w), jnp.float32)
    cparams = pltpu.CompilerParams(
        dimension_semantics=("parallel",),         # shard batch grid across v7x's 2 TCs
        vmem_limit_bytes=vmem_limit)

    def run(single_buffer_weights):
        if single_buffer_weights:
            # Constant-index resident blocks: single buffer halves weight VMEM.
            resident = [pl.BlockSpec(a.shape, lambda i: (0, 0),
                                     pipeline_mode=pl.Buffered(1))
                        for a in operands[1:]]
        else:
            resident = [pl.BlockSpec(a.shape, lambda i: (0, 0))
                        for a in operands[1:]]
        return pl.pallas_call(
            kernel,
            out_shape=out_shape,
            grid=grid,
            in_specs=[x_spec] + resident,
            out_specs=out_spec,
            compiler_params=cparams,
            cost_estimate=cost,
        )(*operands)

    try:
        out = run(True)
    except Exception:
        # Fallback if single-buffered pipeline_mode is unavailable in this JAX build.
        out = run(False)

    b_out = out[:B, :L]
    f_out = out[:B, L:]
    return b_out, f_out


# ----------------------------------------------------------------------------
# Parameter init (matches nn.Linear shapes; weights stored transposed (in, out))
# ----------------------------------------------------------------------------
def init_generic_ae_backcast_params(key, backcast_length, forecast_length,
                                    units, thetas_dim):
    layers = [
        ("fc1", backcast_length, units, True),
        ("fc2", units, units, True),
        ("fc3", units, units, True),
        ("fc4", units, units, True),
        ("b_encoder", units, thetas_dim, True),
        ("b_decoder", thetas_dim, units, True),
        ("backcast_g", units, backcast_length, True),
        ("forecast_linear", units, thetas_dim, True),
        ("forecast_g", thetas_dim, forecast_length, False),
    ]
    params = {}
    for name, fan_in, fan_out, has_bias in layers:
        key, kw, kb = jax.random.split(key, 3)
        bound = 1.0 / (fan_in ** 0.5)
        params[name + "_w"] = jax.random.uniform(
            kw, (fan_in, fan_out), jnp.float32, -bound, bound)
        if has_bias:
            params[name + "_b"] = jax.random.uniform(
                kb, (1, fan_out), jnp.float32, -bound, bound)
    return params


# ----------------------------------------------------------------------------
# Pure-JAX reference (unfused, matches PyTorch module semantics)
# ----------------------------------------------------------------------------
def _reference_forward(x, params, *, active_g=False, cast_bf16=False):
    if x.ndim == 3 and x.shape[-1] == 1:
        x = x[..., 0]
    x = x.astype(jnp.float32)

    def dense(h, name, relu, has_bias=True):
        w = params[name + "_w"]
        if cast_bf16:
            h = h.astype(jnp.bfloat16)
            w = w.astype(jnp.bfloat16)
        out = jnp.dot(h, w, preferred_element_type=jnp.float32)
        if has_bias:
            out = out + params[name + "_b"]
        if relu:
            out = jnp.maximum(out, 0.0)
        return out

    h = dense(x, "fc1", True)
    h = dense(h, "fc2", True)
    h = dense(h, "fc3", True)
    h = dense(h, "fc4", True)

    b = dense(h, "b_encoder", True)
    b = dense(b, "b_decoder", True)
    b = dense(b, "backcast_g", False)

    tf = dense(h, "forecast_linear", False)
    f = dense(tf, "forecast_g", False, has_bias=False)

    if active_g:
        b = jnp.maximum(b, 0.0)
        f = jnp.maximum(f, 0.0)
    return b, f


# ----------------------------------------------------------------------------
# Self-test
# ----------------------------------------------------------------------------
if __name__ == "__main__":
    units = 32
    backcast_length = 16
    forecast_length = 8
    thetas_dim = 5

    key = jax.random.PRNGKey(0)
    key, kx, kp = jax.random.split(key, 3)
    params = init_generic_ae_backcast_params(
        kp, backcast_length, forecast_length, units, thetas_dim)

    # --- Test 1: small batch, single tile, bf16 path, active_g=False ---------
    x = jax.random.normal(kx, (8, backcast_length), jnp.float32)
    b, f = generic_ae_backcast_forward(
        x, params, active_g=False, tile_b=128,
        use_bf16_matmul=True, min_batch_for_pallas=0)
    (b, f) = jax.block_until_ready((b, f))
    b_ref, f_ref = _reference_forward(x, params, active_g=False)
    assert b.shape == (8, backcast_length), b.shape
    assert f.shape == (8, forecast_length), f.shape
    assert jnp.allclose(b, b_ref, atol=2e-2, rtol=2e-2), "backcast mismatch (bf16)"
    assert jnp.allclose(f, f_ref, atol=2e-2, rtol=2e-2), "forecast mismatch (bf16)"

    # --- Test 2: multi-tile grid with batch padding, f32 path, active_g=True --
    key, kx2 = jax.random.split(key)
    x2 = jax.random.normal(kx2, (300, backcast_length), jnp.float32)
    b2, f2 = generic_ae_backcast_forward(
        x2, params, active_g=True, tile_b=128,
        use_bf16_matmul=False, min_batch_for_pallas=0)
    (b2, f2) = jax.block_until_ready((b2, f2))
    b2_ref, f2_ref = _reference_forward(x2, params, active_g=True)
    assert b2.shape == (300, backcast_length), b2.shape
    assert f2.shape == (300, forecast_length), f2.shape
    assert jnp.allclose(b2, b2_ref, atol=2e-2, rtol=2e-2), "backcast mismatch (f32/tiled)"
    assert jnp.allclose(f2, f2_ref, atol=2e-2, rtol=2e-2), "forecast mismatch (f32/tiled)"

    print("KERNEL_OK")
</pallas_src>

<mosaic_0001>
module attributes {stable_mosaic.version = 11 : i64} {
  func.func @kernel(%arg0: i32, %arg1: memref<8x16xbf16, #tpu.memory_space<vmem>>, %arg2: memref<16x32xbf16, #tpu.memory_space<vmem>>, %arg3: memref<1x32xf32, #tpu.memory_space<vmem>>, %arg4: memref<32x32xbf16, #tpu.memory_space<vmem>>, %arg5: memref<1x32xf32, #tpu.memory_space<vmem>>, %arg6: memref<32x32xbf16, #tpu.memory_space<vmem>>, %arg7: memref<1x32xf32, #tpu.memory_space<vmem>>, %arg8: memref<32x32xbf16, #tpu.memory_space<vmem>>, %arg9: memref<1x32xf32, #tpu.memory_space<vmem>>, %arg10: memref<32x128xbf16, #tpu.memory_space<vmem>>, %arg11: memref<1x128xf32, #tpu.memory_space<vmem>>, %arg12: memref<128x32xbf16, #tpu.memory_space<vmem>>, %arg13: memref<1x32xf32, #tpu.memory_space<vmem>>, %arg14: memref<32x16xbf16, #tpu.memory_space<vmem>>, %arg15: memref<1x16xf32, #tpu.memory_space<vmem>>, %arg16: memref<32x8xbf16, #tpu.memory_space<vmem>>, %arg17: memref<1x8xf32, #tpu.memory_space<vmem>>, %arg18: memref<8x24xf32, #tpu.memory_space<vmem>>) attributes {dimension_semantics = [#tpu.dimension_semantics<parallel>], iteration_bounds = array<i64: 1>, scalar_prefetch = 0 : i64, scratch_operands = 0 : i64, tpu.core_type = #tpu.core_type<tc>, window_params = [{transform_indices = @transform_0, window_bounds = array<i64: 8, 16>}, {pipeline_mode = #tpu.pipeline_mode<synchronous>, transform_indices = @transform_1, window_bounds = array<i64: 16, 32>}, {pipeline_mode = #tpu.pipeline_mode<synchronous>, transform_indices = @transform_2, window_bounds = array<i64: 1, 32>}, {pipeline_mode = #tpu.pipeline_mode<synchronous>, transform_indices = @transform_3, window_bounds = array<i64: 32, 32>}, {pipeline_mode = #tpu.pipeline_mode<synchronous>, transform_indices = @transform_4, window_bounds = array<i64: 1, 32>}, {pipeline_mode = #tpu.pipeline_mode<synchronous>, transform_indices = @transform_5, window_bounds = array<i64: 32, 32>}, {pipeline_mode = #tpu.pipeline_mode<synchronous>, transform_indices = @transform_6, window_bounds = array<i64: 1, 32>}, {pipeline_mode = #tpu.pipeline_mode<synchronous>, transform_indices = @transform_7, window_bounds = array<i64: 32, 32>}, {pipeline_mode = #tpu.pipeline_mode<synchronous>, transform_indices = @transform_8, window_bounds = array<i64: 1, 32>}, {pipeline_mode = #tpu.pipeline_mode<synchronous>, transform_indices = @transform_9, window_bounds = array<i64: 32, 128>}, {pipeline_mode = #tpu.pipeline_mode<synchronous>, transform_indices = @transform_10, window_bounds = array<i64: 1, 128>}, {pipeline_mode = #tpu.pipeline_mode<synchronous>, transform_indices = @transform_11, window_bounds = array<i64: 128, 32>}, {pipeline_mode = #tpu.pipeline_mode<synchronous>, transform_indices = @transform_12, window_bounds = array<i64: 1, 32>}, {pipeline_mode = #tpu.pipeline_mode<synchronous>, transform_indices = @transform_13, window_bounds = array<i64: 32, 16>}, {pipeline_mode = #tpu.pipeline_mode<synchronous>, transform_indices = @transform_14, window_bounds = array<i64: 1, 16>}, {pipeline_mode = #tpu.pipeline_mode<synchronous>, transform_indices = @transform_15, window_bounds = array<i64: 32, 8>}, {pipeline_mode = #tpu.pipeline_mode<synchronous>, transform_indices = @transform_16, window_bounds = array<i64: 1, 8>}, {transform_indices = @transform_17, window_bounds = array<i64: 8, 24>}]} {
    %c0 = arith.constant 0 : index
    %c0_0 = arith.constant 0 : index
    %0 = vector.load %arg1[%c0, %c0_0] : memref<8x16xbf16, #tpu.memory_space<vmem>>, vector<8x16xbf16>
    %c0_1 = arith.constant 0 : index
    %c0_2 = arith.constant 0 : index
    %1 = vector.load %arg2[%c0_1, %c0_2] : memref<16x32xbf16, #tpu.memory_space<vmem>>, vector<16x32xbf16>
    %cst = arith.constant dense<0.000000e+00> : vector<8x32xf32>
    %2 = tpu.matmul %0, %1, %cst {dimension_numbers = #tpu.dot_dimension_numbers<[1], [0], [0], [1], [0, 0, 1, 1], [], []>} : vector<8x16xbf16>, vector<16x32xbf16>, vector<8x32xf32> -> vector<8x32xf32>
    %c0_3 = arith.constant 0 : index
    %c0_4 = arith.constant 0 : index
    %3 = vector.load %arg3[%c0_3, %c0_4] : memref<1x32xf32, #tpu.memory_space<vmem>>, vector<1x32xf32>
    %4 = vector.broadcast %3 : vector<1x32xf32> to vector<8x32xf32>
    %5 = arith.addf %2, %4 : vector<8x32xf32>
    %cst_5 = arith.constant 0.000000e+00 : f32
    %6 = vector.broadcast %cst_5 : f32 to vector<8x32xf32>
    %7 = arith.maximumf %5, %6 : vector<8x32xf32>
    %8 = arith.truncf %7 : vector<8x32xf32> to vector<8x32xbf16>
    %c0_6 = arith.constant 0 : index
    %c0_7 = arith.constant 0 : index
    %9 = vector.load %arg4[%c0_6, %c0_7] : memref<32x32xbf16, #tpu.memory_space<vmem>>, vector<32x32xbf16>
    %cst_8 = arith.constant dense<0.000000e+00> : vector<8x32xf32>
    %10 = tpu.matmul %8, %9, %cst_8 {dimension_numbers = #tpu.dot_dimension_numbers<[1], [0], [0], [1], [0, 0, 1, 1], [], []>} : vector<8x32xbf16>, vector<32x32xbf16>, vector<8x32xf32> -> vector<8x32xf32>
    %c0_9 = arith.constant 0 : index
    %c0_10 = arith.constant 0 : index
    %11 = vector.load %arg5[%c0_9, %c0_10] : memref<1x32xf32, #tpu.memory_space<vmem>>, vector<1x32xf32>
    %12 = vector.broadcast %11 : vector<1x32xf32> to vector<8x32xf32>
    %13 = arith.addf %10, %12 : vector<8x32xf32>
    %cst_11 = arith.constant 0.000000e+00 : f32
    %14 = vector.broadcast %cst_11 : f32 to vector<8x32xf32>
    %15 = arith.maximumf %13, %14 : vector<8x32xf32>
    %16 = arith.truncf %15 : vector<8x32xf32> to vector<8x32xbf16>
    %c0_12 = arith.constant 0 : index
    %c0_13 = arith.constant 0 : index
    %17 = vector.load %arg6[%c0_12, %c0_13] : memref<32x32xbf16, #tpu.memory_space<vmem>>, vector<32x32xbf16>
    %cst_14 = arith.constant dense<0.000000e+00> : vector<8x32xf32>
    %18 = tpu.matmul %16, %17, %cst_14 {dimension_numbers = #tpu.dot_dimension_numbers<[1], [0], [0], [1], [0, 0, 1, 1], [], []>} : vector<8x32xbf16>, vector<32x32xbf16>, vector<8x32xf32> -> vector<8x32xf32>
    %c0_15 = arith.constant 0 : index
    %c0_16 = arith.constant 0 : index
    %19 = vector.load %arg7[%c0_15, %c0_16] : memref<1x32xf32, #tpu.memory_space<vmem>>, vector<1x32xf32>
    %20 = vector.broadcast %19 : vector<1x32xf32> to vector<8x32xf32>
    %21 = arith.addf %18, %20 : vector<8x32xf32>
    %cst_17 = arith.constant 0.000000e+00 : f32
    %22 = vector.broadcast %cst_17 : f32 to vector<8x32xf32>
    %23 = arith.maximumf %21, %22 : vector<8x32xf32>
    %24 = arith.truncf %23 : vector<8x32xf32> to vector<8x32xbf16>
    %c0_18 = arith.constant 0 : index
    %c0_19 = arith.constant 0 : index
    %25 = vector.load %arg8[%c0_18, %c0_19] : memref<32x32xbf16, #tpu.memory_space<vmem>>, vector<32x32xbf16>
    %cst_20 = arith.constant dense<0.000000e+00> : vector<8x32xf32>
    %26 = tpu.matmul %24, %25, %cst_20 {dimension_numbers = #tpu.dot_dimension_numbers<[1], [0], [0], [1], [0, 0, 1, 1], [], []>} : vector<8x32xbf16>, vector<32x32xbf16>, vector<8x32xf32> -> vector<8x32xf32>
    %c0_21 = arith.constant 0 : index
    %c0_22 = arith.constant 0 : index
    %27 = vector.load %arg9[%c0_21, %c0_22] : memref<1x32xf32, #tpu.memory_space<vmem>>, vector<1x32xf32>
    %28 = vector.broadcast %27 : vector<1x32xf32> to vector<8x32xf32>
    %29 = arith.addf %26, %28 : vector<8x32xf32>
    %cst_23 = arith.constant 0.000000e+00 : f32
    %30 = vector.broadcast %cst_23 : f32 to vector<8x32xf32>
    %31 = arith.maximumf %29, %30 : vector<8x32xf32>
    %32 = arith.truncf %31 : vector<8x32xf32> to vector<8x32xbf16>
    %c0_24 = arith.constant 0 : index
    %c0_25 = arith.constant 0 : index
    %33 = vector.load %arg10[%c0_24, %c0_25] : memref<32x128xbf16, #tpu.memory_space<vmem>>, vector<32x128xbf16>
    %cst_26 = arith.constant dense<0.000000e+00> : vector<8x128xf32>
    %34 = tpu.matmul %32, %33, %cst_26 {dimension_numbers = #tpu.dot_dimension_numbers<[1], [0], [0], [1], [0, 0, 1, 1], [], []>} : vector<8x32xbf16>, vector<32x128xbf16>, vector<8x128xf32> -> vector<8x128xf32>
    %c0_27 = arith.constant 0 : index
    %c0_28 = arith.constant 0 : index
    %35 = vector.load %arg11[%c0_27, %c0_28] : memref<1x128xf32, #tpu.memory_space<vmem>>, vector<1x128xf32>
    %36 = vector.broadcast %35 : vector<1x128xf32> to vector<8x128xf32>
    %37 = arith.addf %34, %36 : vector<8x128xf32>
    %cst_29 = arith.constant 0.000000e+00 : f32
    %38 = vector.broadcast %cst_29 : f32 to vector<8x128xf32>
    %39 = arith.maximumf %37, %38 : vector<8x128xf32>
    %40 = arith.truncf %39 : vector<8x128xf32> to vector<8x128xbf16>
    %c0_30 = arith.constant 0 : index
    %c0_31 = arith.constant 0 : index
    %41 = vector.load %arg12[%c0_30, %c0_31] : memref<128x32xbf16, #tpu.memory_space<vmem>>, vector<128x32xbf16>
    %cst_32 = arith.constant dense<0.000000e+00> : vector<8x32xf32>
    %42 = tpu.matmul %40, %41, %cst_32 {dimension_numbers = #tpu.dot_dimension_numbers<[1], [0], [0], [1], [0, 0, 1, 1], [], []>} : vector<8x128xbf16>, vector<128x32xbf16>, vector<8x32xf32> -> vector<8x32xf32>
    %c0_33 = arith.constant 0 : index
    %c0_34 = arith.constant 0 : index
    %43 = vector.load %arg13[%c0_33, %c0_34] : memref<1x32xf32, #tpu.memory_space<vmem>>, vector<1x32xf32>
    %44 = vector.broadcast %43 : vector<1x32xf32> to vector<8x32xf32>
    %45 = arith.addf %42, %44 : vector<8x32xf32>
    %cst_35 = arith.constant 0.000000e+00 : f32
    %46 = vector.broadcast %cst_35 : f32 to vector<8x32xf32>
    %47 = arith.maximumf %45, %46 : vector<8x32xf32>
    %48 = arith.truncf %47 : vector<8x32xf32> to vector<8x32xbf16>
    %c0_36 = arith.constant 0 : index
    %c0_37 = arith.constant 0 : index
    %49 = vector.load %arg14[%c0_36, %c0_37] : memref<32x16xbf16, #tpu.memory_space<vmem>>, vector<32x16xbf16>
    %cst_38 = arith.constant dense<0.000000e+00> : vector<8x16xf32>
    %50 = tpu.matmul %48, %49, %cst_38 {dimension_numbers = #tpu.dot_dimension_numbers<[1], [0], [0], [1], [0, 0, 1, 1], [], []>} : vector<8x32xbf16>, vector<32x16xbf16>, vector<8x16xf32> -> vector<8x16xf32>
    %c0_39 = arith.constant 0 : index
    %c0_40 = arith.constant 0 : index
    %51 = vector.load %arg15[%c0_39, %c0_40] : memref<1x16xf32, #tpu.memory_space<vmem>>, vector<1x16xf32>
    %52 = vector.broadcast %51 : vector<1x16xf32> to vector<8x16xf32>
    %53 = arith.addf %50, %52 : vector<8x16xf32>
    %c0_41 = arith.constant 0 : index
    %c0_42 = arith.constant 0 : index
    %54 = vector.load %arg16[%c0_41, %c0_42] : memref<32x8xbf16, #tpu.memory_space<vmem>>, vector<32x8xbf16>
    %cst_43 = arith.constant dense<0.000000e+00> : vector<8x8xf32>
    %55 = tpu.matmul %32, %54, %cst_43 {dimension_numbers = #tpu.dot_dimension_numbers<[1], [0], [0], [1], [0, 0, 1, 1], [], []>} : vector<8x32xbf16>, vector<32x8xbf16>, vector<8x8xf32> -> vector<8x8xf32>
    %c0_44 = arith.constant 0 : index
    %c0_45 = arith.constant 0 : index
    %56 = vector.load %arg17[%c0_44, %c0_45] : memref<1x8xf32, #tpu.memory_space<vmem>>, vector<1x8xf32>
    %57 = vector.broadcast %56 : vector<1x8xf32> to vector<8x8xf32>
    %58 = arith.addf %55, %57 : vector<8x8xf32>
    %59 = tpu.concatenate %53, %58 in 1 : vector<8x16xf32>, vector<8x8xf32> -> vector<8x24xf32>
    %c0_46 = arith.constant 0 : index
    %c0_47 = arith.constant 0 : index
    %60 = vector.load %arg18[%c0_46, %c0_47] : memref<8x24xf32, #tpu.memory_space<vmem>>, vector<8x24xf32>
    tpu.vector_store %arg18[%c0_46, %c0_47], %59 {strides = array<i32>} : memref<8x24xf32, #tpu.memory_space<vmem>>, vector<8x24xf32>,
    return
  }
  func.func @transform_0(%arg0: i32) -> (i32, i32) {
    %c0_i32 = arith.constant 0 : i32
    %c0_i32_0 = arith.constant 0 : i32
    return %arg0, %c0_i32 : i32, i32
  }
  func.func @transform_1(%arg0: i32) -> (i32, i32) {
    %c0_i32 = arith.constant 0 : i32
    %c0_i32_0 = arith.constant 0 : i32
    %c0_i32_1 = arith.constant 0 : i32
    return %c0_i32, %c0_i32_0 : i32, i32
  }
  func.func @transform_2(%arg0: i32) -> (i32, i32) {
    %c0_i32 = arith.constant 0 : i32
    %c0_i32_0 = arith.constant 0 : i32
    %c0_i32_1 = arith.constant 0 : i32
    return %c0_i32, %c0_i32_0 : i32, i32
  }
  func.func @transform_3(%arg0: i32) -> (i32, i32) {
    %c0_i32 = arith.constant 0 : i32
    %c0_i32_0 = arith.constant 0 : i32
    %c0_i32_1 = arith.constant 0 : i32
    return %c0_i32, %c0_i32_0 : i32, i32
  }
  func.func @transform_4(%arg0: i32) -> (i32, i32) {
    %c0_i32 = arith.constant 0 : i32
    %c0_i32_0 = arith.constant 0 : i32
    %c0_i32_1 = arith.constant 0 : i32
    return %c0_i32, %c0_i32_0 : i32, i32
  }
  func.func @transform_5(%arg0: i32) -> (i32, i32) {
    %c0_i32 = arith.constant 0 : i32
    %c0_i32_0 = arith.constant 0 : i32
    %c0_i32_1 = arith.constant 0 : i32
    return %c0_i32, %c0_i32_0 : i32, i32
  }
  func.func @transform_6(%arg0: i32) -> (i32, i32) {
    %c0_i32 = arith.constant 0 : i32
    %c0_i32_0 = arith.constant 0 : i32
    %c0_i32_1 = arith.constant 0 : i32
    return %c0_i32, %c0_i32_0 : i32, i32
  }
  func.func @transform_7(%arg0: i32) -> (i32, i32) {
    %c0_i32 = arith.constant 0 : i32
    %c0_i32_0 = arith.constant 0 : i32
    %c0_i32_1 = arith.constant 0 : i32
    return %c0_i32, %c0_i32_0 : i32, i32
  }
  func.func @transform_8(%arg0: i32) -> (i32, i32) {
    %c0_i32 = arith.constant 0 : i32
    %c0_i32_0 = arith.constant 0 : i32
    %c0_i32_1 = arith.constant 0 : i32
    return %c0_i32, %c0_i32_0 : i32, i32
  }
  func.func @transform_9(%arg0: i32) -> (i32, i32) {
    %c0_i32 = arith.constant 0 : i32
    %c0_i32_0 = arith.constant 0 : i32
    %c0_i32_1 = arith.constant 0 : i32
    return %c0_i32, %c0_i32_0 : i32, i32
  }
  func.func @transform_10(%arg0: i32) -> (i32, i32) {
    %c0_i32 = arith.constant 0 : i32
    %c0_i32_0 = arith.constant 0 : i32
    %c0_i32_1 = arith.constant 0 : i32
    return %c0_i32, %c0_i32_0 : i32, i32
  }
  func.func @transform_11(%arg0: i32) -> (i32, i32) {
    %c0_i32 = arith.constant 0 : i32
    %c0_i32_0 = arith.constant 0 : i32
    %c0_i32_1 = arith.constant 0 : i32
    return %c0_i32, %c0_i32_0 : i32, i32
  }
  func.func @transform_12(%arg0: i32) -> (i32, i32) {
    %c0_i32 = arith.constant 0 : i32
    %c0_i32_0 = arith.constant 0 : i32
    %c0_i32_1 = arith.constant 0 : i32
    return %c0_i32, %c0_i32_0 : i32, i32
  }
  func.func @transform_13(%arg0: i32) -> (i32, i32) {
    %c0_i32 = arith.constant 0 : i32
    %c0_i32_0 = arith.constant 0 : i32
    %c0_i32_1 = arith.constant 0 : i32
    return %c0_i32, %c0_i32_0 : i32, i32
  }
  func.func @transform_14(%arg0: i32) -> (i32, i32) {
    %c0_i32 = arith.constant 0 : i32
    %c0_i32_0 = arith.constant 0 : i32
    %c0_i32_1 = arith.constant 0 : i32
    return %c0_i32, %c0_i32_0 : i32, i32
  }
  func.func @transform_15(%arg0: i32) -> (i32, i32) {
    %c0_i32 = arith.constant 0 : i32
    %c0_i32_0 = arith.constant 0 : i32
    %c0_i32_1 = arith.constant 0 : i32
    return %c0_i32, %c0_i32_0 : i32, i32
  }
  func.func @transform_16(%arg0: i32) -> (i32, i32) {
    %c0_i32 = arith.constant 0 : i32
    %c0_i32_0 = arith.constant 0 : i32
    %c0_i32_1 = arith.constant 0 : i32
    return %c0_i32, %c0_i32_0 : i32, i32
  }
  func.func @transform_17(%arg0: i32) -> (i32, i32) {
    %c0_i32 = arith.constant 0 : i32
    %c0_i32_0 = arith.constant 0 : i32
    return %arg0, %c0_i32 : i32, i32
  }
}

module attributes {stable_mosaic.version = 11 : i64} {
  func.func @kernel(%arg0: i32, %arg1: memref<8x16xbf16, #tpu.memory_space<vmem>>, %arg2: memref<16x32xbf16, #tpu.memory_space<vmem>>, %arg3: memref<1x32xf32, #tpu.memory_space<vmem>>, %arg4: memref<32x32xbf16, #tpu.memory_space<vmem>>, %arg5: memref<1x32xf32, #tpu.memory_space<vmem>>, %arg6: memref<32x32xbf16, #tpu.memory_space<vmem>>, %arg7: memref<1x32xf32, #tpu.memory_space<vmem>>, %arg8: memref<32x32xbf16, #tpu.memory_space<vmem>>, %arg9: memref<1x32xf32, #tpu.memory_space<vmem>>, %arg10: memref<32x128xbf16, #tpu.memory_space<vmem>>, %arg11: memref<1x128xf32, #tpu.memory_space<vmem>>, %arg12: memref<128x32xbf16, #tpu.memory_space<vmem>>, %arg13: memref<1x32xf32, #tpu.memory_space<vmem>>, %arg14: memref<32x16xbf16, #tpu.memory_space<vmem>>, %arg15: memref<1x16xf32, #tpu.memory_space<vmem>>, %arg16: memref<32x8xbf16, #tpu.memory_space<vmem>>, %arg17: memref<1x8xf32, #tpu.memory_space<vmem>>, %arg18: memref<8x24xf32, #tpu.memory_space<vmem>>) attributes {dimension_semantics = [#tpu.dimension_semantics<parallel>], iteration_bounds = array<i64: 1>, scalar_prefetch = 0 : i64, scratch_operands = 0 : i64, tpu.core_type = #tpu.core_type<tc>, window_params = [{transform_indices = @transform_0, window_bounds = array<i64: 8, 16>}, {pipeline_mode = #tpu.pipeline_mode<synchronous>, transform_indices = @transform_1, window_bounds = array<i64: 16, 32>}, {pipeline_mode = #tpu.pipeline_mode<synchronous>, transform_indices = @transform_2, window_bounds = array<i64: 1, 32>}, {pipeline_mode = #tpu.pipeline_mode<synchronous>, transform_indices = @transform_3, window_bounds = array<i64: 32, 32>}, {pipeline_mode = #tpu.pipeline_mode<synchronous>, transform_indices = @transform_4, window_bounds = array<i64: 1, 32>}, {pipeline_mode = #tpu.pipeline_mode<synchronous>, transform_indices = @transform_5, window_bounds = array<i64: 32, 32>}, {pipeline_mode = #tpu.pipeline_mode<synchronous>, transform_indices = @transform_6, window_bounds = array<i64: 1, 32>}, {pipeline_mode = #tpu.pipeline_mode<synchronous>, transform_indices = @transform_7, window_bounds = array<i64: 32, 32>}, {pipeline_mode = #tpu.pipeline_mode<synchronous>, transform_indices = @transform_8, window_bounds = array<i64: 1, 32>}, {pipeline_mode = #tpu.pipeline_mode<synchronous>, transform_indices = @transform_9, window_bounds = array<i64: 32, 128>}, {pipeline_mode = #tpu.pipeline_mode<synchronous>, transform_indices = @transform_10, window_bounds = array<i64: 1, 128>}, {pipeline_mode = #tpu.pipeline_mode<synchronous>, transform_indices = @transform_11, window_bounds = array<i64: 128, 32>}, {pipeline_mode = #tpu.pipeline_mode<synchronous>, transform_indices = @transform_12, window_bounds = array<i64: 1, 32>}, {pipeline_mode = #tpu.pipeline_mode<synchronous>, transform_indices = @transform_13, window_bounds = array<i64: 32, 16>}, {pipeline_mode = #tpu.pipeline_mode<synchronous>, transform_indices = @transform_14, window_bounds = array<i64: 1, 16>}, {pipeline_mode = #tpu.pipeline_mode<synchronous>, transform_indices = @transform_15, window_bounds = array<i64: 32, 8>}, {pipeline_mode = #tpu.pipeline_mode<synchronous>, transform_indices = @transform_16, window_bounds = array<i64: 1, 8>}, {transform_indices = @transform_17, window_bounds = array<i64: 8, 24>}]} {
    %c0 = arith.constant 0 : index
    %c0_0 = arith.constant 0 : index
    %0 = vector.load %arg1[%c0, %c0_0] : memref<8x16xbf16, #tpu.memory_space<vmem>>, vector<8x16xbf16>
    %c0_1 = arith.constant 0 : index
    %c0_2 = arith.constant 0 : index
    %1 = vector.load %arg2[%c0_1, %c0_2] : memref<16x32xbf16, #tpu.memory_space<vmem>>, vector<16x32xbf16>
    %cst = arith.constant dense<0.000000e+00> : vector<8x32xf32>
    %2 = tpu.matmul %0, %1, %cst {dimension_numbers = #tpu.dot_dimension_numbers<[1], [0], [0], [1], [0, 0, 1, 1], [], []>} : vector<8x16xbf16>, vector<16x32xbf16>, vector<8x32xf32> -> vector<8x32xf32>
    %c0_3 = arith.constant 0 : index
    %c0_4 = arith.constant 0 : index
    %3 = vector.load %arg3[%c0_3, %c0_4] : memref<1x32xf32, #tpu.memory_space<vmem>>, vector<1x32xf32>
    %4 = vector.broadcast %3 : vector<1x32xf32> to vector<8x32xf32>
    %5 = arith.addf %2, %4 : vector<8x32xf32>
    %cst_5 = arith.constant 0.000000e+00 : f32
    %6 = vector.broadcast %cst_5 : f32 to vector<8x32xf32>
    %7 = arith.maximumf %5, %6 : vector<8x32xf32>
    %8 = arith.truncf %7 : vector<8x32xf32> to vector<8x32xbf16>
    %c0_6 = arith.constant 0 : index
    %c0_7 = arith.constant 0 : index
    %9 = vector.load %arg4[%c0_6, %c0_7] : memref<32x32xbf16, #tpu.memory_space<vmem>>, vector<32x32xbf16>
    %cst_8 = arith.constant dense<0.000000e+00> : vector<8x32xf32>
    %10 = tpu.matmul %8, %9, %cst_8 {dimension_numbers = #tpu.dot_dimension_numbers<[1], [0], [0], [1], [0, 0, 1, 1], [], []>} : vector<8x32xbf16>, vector<32x32xbf16>, vector<8x32xf32> -> vector<8x32xf32>
    %c0_9 = arith.constant 0 : index
    %c0_10 = arith.constant 0 : index
    %11 = vector.load %arg5[%c0_9, %c0_10] : memref<1x32xf32, #tpu.memory_space<vmem>>, vector<1x32xf32>
    %12 = vector.broadcast %11 : vector<1x32xf32> to vector<8x32xf32>
    %13 = arith.addf %10, %12 : vector<8x32xf32>
    %cst_11 = arith.constant 0.000000e+00 : f32
    %14 = vector.broadcast %cst_11 : f32 to vector<8x32xf32>
    %15 = arith.maximumf %13, %14 : vector<8x32xf32>
    %16 = arith.truncf %15 : vector<8x32xf32> to vector<8x32xbf16>
    %c0_12 = arith.constant 0 : index
    %c0_13 = arith.constant 0 : index
    %17 = vector.load %arg6[%c0_12, %c0_13] : memref<32x32xbf16, #tpu.memory_space<vmem>>, vector<32x32xbf16>
    %cst_14 = arith.constant dense<0.000000e+00> : vector<8x32xf32>
    %18 = tpu.matmul %16, %17, %cst_14 {dimension_numbers = #tpu.dot_dimension_numbers<[1], [0], [0], [1], [0, 0, 1, 1], [], []>} : vector<8x32xbf16>, vector<32x32xbf16>, vector<8x32xf32> -> vector<8x32xf32>
    %c0_15 = arith.constant 0 : index
    %c0_16 = arith.constant 0 : index
    %19 = vector.load %arg7[%c0_15, %c0_16] : memref<1x32xf32, #tpu.memory_space<vmem>>, vector<1x32xf32>
    %20 = vector.broadcast %19 : vector<1x32xf32> to vector<8x32xf32>
    %21 = arith.addf %18, %20 : vector<8x32xf32>
    %cst_17 = arith.constant 0.000000e+00 : f32
    %22 = vector.broadcast %cst_17 : f32 to vector<8x32xf32>
    %23 = arith.maximumf %21, %22 : vector<8x32xf32>
    %24 = arith.truncf %23 : vector<8x32xf32> to vector<8x32xbf16>
    %c0_18 = arith.constant 0 : index
    %c0_19 = arith.constant 0 : index
    %25 = vector.load %arg8[%c0_18, %c0_19] : memref<32x32xbf16, #tpu.memory_space<vmem>>, vector<32x32xbf16>
    %cst_20 = arith.constant dense<0.000000e+00> : vector<8x32xf32>
    %26 = tpu.matmul %24, %25, %cst_20 {dimension_numbers = #tpu.dot_dimension_numbers<[1], [0], [0], [1], [0, 0, 1, 1], [], []>} : vector<8x32xbf16>, vector<32x32xbf16>, vector<8x32xf32> -> vector<8x32xf32>
    %c0_21 = arith.constant 0 : index
    %c0_22 = arith.constant 0 : index
    %27 = vector.load %arg9[%c0_21, %c0_22] : memref<1x32xf32, #tpu.memory_space<vmem>>, vector<1x32xf32>
    %28 = vector.broadcast %27 : vector<1x32xf32> to vector<8x32xf32>
    %29 = arith.addf %26, %28 : vector<8x32xf32>
    %cst_23 = arith.constant 0.000000e+00 : f32
    %30 = vector.broadcast %cst_23 : f32 to vector<8x32xf32>
    %31 = arith.maximumf %29, %30 : vector<8x32xf32>
    %32 = arith.truncf %31 : vector<8x32xf32> to vector<8x32xbf16>
    %c0_24 = arith.constant 0 : index
    %c0_25 = arith.constant 0 : index
    %33 = vector.load %arg10[%c0_24, %c0_25] : memref<32x128xbf16, #tpu.memory_space<vmem>>, vector<32x128xbf16>
    %cst_26 = arith.constant dense<0.000000e+00> : vector<8x128xf32>
    %34 = tpu.matmul %32, %33, %cst_26 {dimension_numbers = #tpu.dot_dimension_numbers<[1], [0], [0], [1], [0, 0, 1, 1], [], []>} : vector<8x32xbf16>, vector<32x128xbf16>, vector<8x128xf32> -> vector<8x128xf32>
    %c0_27 = arith.constant 0 : index
    %c0_28 = arith.constant 0 : index
    %35 = vector.load %arg11[%c0_27, %c0_28] : memref<1x128xf32, #tpu.memory_space<vmem>>, vector<1x128xf32>
    %36 = vector.broadcast %35 : vector<1x128xf32> to vector<8x128xf32>
    %37 = arith.addf %34, %36 : vector<8x128xf32>
    %cst_29 = arith.constant 0.000000e+00 : f32
    %38 = vector.broadcast %cst_29 : f32 to vector<8x128xf32>
    %39 = arith.maximumf %37, %38 : vector<8x128xf32>
    %40 = arith.truncf %39 : vector<8x128xf32> to vector<8x128xbf16>
    %c0_30 = arith.constant 0 : index
    %c0_31 = arith.constant 0 : index
    %41 = vector.load %arg12[%c0_30, %c0_31] : memref<128x32xbf16, #tpu.memory_space<vmem>>, vector<128x32xbf16>
    %cst_32 = arith.constant dense<0.000000e+00> : vector<8x32xf32>
    %42 = tpu.matmul %40, %41, %cst_32 {dimension_numbers = #tpu.dot_dimension_numbers<[1], [0], [0], [1], [0, 0, 1, 1], [], []>} : vector<8x128xbf16>, vector<128x32xbf16>, vector<8x32xf32> -> vector<8x32xf32>
    %c0_33 = arith.constant 0 : index
    %c0_34 = arith.constant 0 : index
    %43 = vector.load %arg13[%c0_33, %c0_34] : memref<1x32xf32, #tpu.memory_space<vmem>>, vector<1x32xf32>
    %44 = vector.broadcast %43 : vector<1x32xf32> to vector<8x32xf32>
    %45 = arith.addf %42, %44 : vector<8x32xf32>
    %cst_35 = arith.constant 0.000000e+00 : f32
    %46 = vector.broadcast %cst_35 : f32 to vector<8x32xf32>
    %47 = arith.maximumf %45, %46 : vector<8x32xf32>
    %48 = arith.truncf %47 : vector<8x32xf32> to vector<8x32xbf16>
    %c0_36 = arith.constant 0 : index
    %c0_37 = arith.constant 0 : index
    %49 = vector.load %arg14[%c0_36, %c0_37] : memref<32x16xbf16, #tpu.memory_space<vmem>>, vector<32x16xbf16>
    %cst_38 = arith.constant dense<0.000000e+00> : vector<8x16xf32>
    %50 = tpu.matmul %48, %49, %cst_38 {dimension_numbers = #tpu.dot_dimension_numbers<[1], [0], [0], [1], [0, 0, 1, 1], [], []>} : vector<8x32xbf16>, vector<32x16xbf16>, vector<8x16xf32> -> vector<8x16xf32>
    %c0_39 = arith.constant 0 : index
    %c0_40 = arith.constant 0 : index
    %51 = vector.load %arg15[%c0_39, %c0_40] : memref<1x16xf32, #tpu.memory_space<vmem>>, vector<1x16xf32>
    %52 = vector.broadcast %51 : vector<1x16xf32> to vector<8x16xf32>
    %53 = arith.addf %50, %52 : vector<8x16xf32>
    %c0_41 = arith.constant 0 : index
    %c0_42 = arith.constant 0 : index
    %54 = vector.load %arg16[%c0_41, %c0_42] : memref<32x8xbf16, #tpu.memory_space<vmem>>, vector<32x8xbf16>
    %cst_43 = arith.constant dense<0.000000e+00> : vector<8x8xf32>
    %55 = tpu.matmul %32, %54, %cst_43 {dimension_numbers = #tpu.dot_dimension_numbers<[1], [0], [0], [1], [0, 0, 1, 1], [], []>} : vector<8x32xbf16>, vector<32x8xbf16>, vector<8x8xf32> -> vector<8x8xf32>
    %c0_44 = arith.constant 0 : index
    %c0_45 = arith.constant 0 : index
    %56 = vector.load %arg17[%c0_44, %c0_45] : memref<1x8xf32, #tpu.memory_space<vmem>>, vector<1x8xf32>
    %57 = vector.broadcast %56 : vector<1x8xf32> to vector<8x8xf32>
    %58 = arith.addf %55, %57 : vector<8x8xf32>
    %59 = tpu.concatenate %53, %58 in 1 : vector<8x16xf32>, vector<8x8xf32> -> vector<8x24xf32>
    %c0_46 = arith.constant 0 : index
    %c0_47 = arith.constant 0 : index
    %60 = vector.load %arg18[%c0_46, %c0_47] : memref<8x24xf32, #tpu.memory_space<vmem>>, vector<8x24xf32>
    tpu.vector_store %arg18[%c0_46, %c0_47], %59 {strides = array<i32>} : memref<8x24xf32, #tpu.memory_space<vmem>>, vector<8x24xf32>,
    return
  }
  func.func @transform_0(%arg0: i32) -> (i32, i32) {
    %c0_i32 = arith.constant 0 : i32
    %c0_i32_0 = arith.constant 0 : i32
    return %arg0, %c0_i32 : i32, i32
  }
  func.func @transform_1(%arg0: i32) -> (i32, i32) {
    %c0_i32 = arith.constant 0 : i32
    %c0_i32_0 = arith.constant 0 : i32
    %c0_i32_1 = arith.constant 0 : i32
    return %c0_i32, %c0_i32_0 : i32, i32
  }
  func.func @transform_2(%arg0: i32) -> (i32, i32) {
    %c0_i32 = arith.constant 0 : i32
    %c0_i32_0 = arith.constant 0 : i32
    %c0_i32_1 = arith.constant 0 : i32
    return %c0_i32, %c0_i32_0 : i32, i32
  }
  func.func @transform_3(%arg0: i32) -> (i32, i32) {
    %c0_i32 = arith.constant 0 : i32
    %c0_i32_0 = arith.constant 0 : i32
    %c0_i32_1 = arith.constant 0 : i32
    return %c0_i32, %c0_i32_0 : i32, i32
  }
  func.func @transform_4(%arg0: i32) -> (i32, i32) {
    %c0_i32 = arith.constant 0 : i32
    %c0_i32_0 = arith.constant 0 : i32
    %c0_i32_1 = arith.constant 0 : i32
    return %c0_i32, %c0_i32_0 : i32, i32
  }
  func.func @transform_5(%arg0: i32) -> (i32, i32) {
    %c0_i32 = arith.constant 0 : i32
    %c0_i32_0 = arith.constant 0 : i32
    %c0_i32_1 = arith.constant 0 : i32
    return %c0_i32, %c0_i32_0 : i32, i32
  }
  func.func @transform_6(%arg0: i32) -> (i32, i32) {
    %c0_i32 = arith.constant 0 : i32
    %c0_i32_0 = arith.constant 0 : i32
    %c0_i32_1 = arith.constant 0 : i32
    return %c0_i32, %c0_i32_0 : i32, i32
  }
  func.func @transform_7(%arg0: i32) -> (i32, i32) {
    %c0_i32 = arith.constant 0 : i32
    %c0_i32_0 = arith.constant 0 : i32
    %c0_i32_1 = arith.constant 0 : i32
    return %c0_i32, %c0_i32_0 : i32, i32
  }
  func.func @transform_8(%arg0: i32) -> (i32, i32) {
    %c0_i32 = arith.constant 0 : i32
    %c0_i32_0 = arith.constant 0 : i32
    %c0_i32_1 = arith.constant 0 : i32
    return %c0_i32, %c0_i32_0 : i32, i32
  }
  func.func @transform_9(%arg0: i32) -> (i32, i32) {
    %c0_i32 = arith.constant 0 : i32
    %c0_i32_0 = arith.constant 0 : i32
    %c0_i32_1 = arith.constant 0 : i32
    return %c0_i32, %c0_i32_0 : i32, i32
  }
  func.func @transform_10(%arg0: i32) -> (i32, i32) {
    %c0_i32 = arith.constant 0 : i32
    %c0_i32_0 = arith.constant 0 : i32
    %c0_i32_1 = arith.constant 0 : i32
    return %c0_i32, %c0_i32_0 : i32, i32
  }
  func.func @transform_11(%arg0: i32) -> (i32, i32) {
    %c0_i32 = arith.constant 0 : i32
    %c0_i32_0 = arith.constant 0 : i32
    %c0_i32_1 = arith.constant 0 : i32
    return %c0_i32, %c0_i32_0 : i32, i32
  }
  func.func @transform_12(%arg0: i32) -> (i32, i32) {
    %c0_i32 = arith.constant 0 : i32
    %c0_i32_0 = arith.constant 0 : i32
    %c0_i32_1 = arith.constant 0 : i32
    return %c0_i32, %c0_i32_0 : i32, i32
  }
  func.func @transform_13(%arg0: i32) -> (i32, i32) {
    %c0_i32 = arith.constant 0 : i32
    %c0_i32_0 = arith.constant 0 : i32
    %c0_i32_1 = arith.constant 0 : i32
    return %c0_i32, %c0_i32_0 : i32, i32
  }
  func.func @transform_14(%arg0: i32) -> (i32, i32) {
    %c0_i32 = arith.constant 0 : i32
    %c0_i32_0 = arith.constant 0 : i32
    %c0_i32_1 = arith.constant 0 : i32
    return %c0_i32, %c0_i32_0 : i32, i32
  }
  func.func @transform_15(%arg0: i32) -> (i32, i32) {
    %c0_i32 = arith.constant 0 : i32
    %c0_i32_0 = arith.constant 0 : i32
    %c0_i32_1 = arith.constant 0 : i32
    return %c0_i32, %c0_i32_0 : i32, i32
  }
  func.func @transform_16(%arg0: i32) -> (i32, i32) {
    %c0_i32 = arith.constant 0 : i32
    %c0_i32_0 = arith.constant 0 : i32
    %c0_i32_1 = arith.constant 0 : i32
    return %c0_i32, %c0_i32_0 : i32, i32
  }
  func.func @transform_17(%arg0: i32) -> (i32, i32) {
    %c0_i32 = arith.constant 0 : i32
    %c0_i32_0 = arith.constant 0 : i32
    return %arg0, %c0_i32 : i32, i32
  }
}

</mosaic_0001>

<llo_original>
// kernel: tpu_custom_call.1
$region0: #{tpu_custom_call.1}
  #allocation0 [shape = 'u32[]', space=smem, size = 0x4, offset = 0x4, fixed_abs, tag = 'smem constant byte address 0x4 - core index']
  #allocation1 [shape = 'u32[144,128]{1,0:T(1,128)}', space=vmem, size = 0x12000, scoped, tag = 'internal scratch']
  %s0 = inlined_call_operand.vmem [shape: bf16[8,16], index: 0, kind: input, shape index: {}]
  %s1 = inlined_call_operand.vmem [shape: bf16[16,32], index: 1, kind: input, shape index: {}]
  %s2 = inlined_call_operand.vmem [shape: f32[1,32], index: 2, kind: input, shape index: {}]
  %s3 = inlined_call_operand.vmem [shape: bf16[32,32], index: 3, kind: input, shape index: {}]
  %s4 = inlined_call_operand.vmem [shape: f32[1,32], index: 4, kind: input, shape index: {}]
  %s5 = inlined_call_operand.vmem [shape: bf16[32,32], index: 5, kind: input, shape index: {}]
  %s6 = inlined_call_operand.vmem [shape: f32[1,32], index: 6, kind: input, shape index: {}]
  %s7 = inlined_call_operand.vmem [shape: bf16[32,32], index: 7, kind: input, shape index: {}]
  %s8 = inlined_call_operand.vmem [shape: f32[1,32], index: 8, kind: input, shape index: {}]
  %s9 = inlined_call_operand.vmem [shape: bf16[32,128], index: 9, kind: input, shape index: {}]
  %s10 = inlined_call_operand.vmem [shape: f32[1,128], index: 10, kind: input, shape index: {}]
  %s11 = inlined_call_operand.vmem [shape: bf16[128,32], index: 11, kind: input, shape index: {}]
  %s12 = inlined_call_operand.vmem [shape: f32[1,32], index: 12, kind: input, shape index: {}]
  %s13 = inlined_call_operand.vmem [shape: bf16[32,16], index: 13, kind: input, shape index: {}]
  %s14 = inlined_call_operand.vmem [shape: f32[1,16], index: 14, kind: input, shape index: {}]
  %s15 = inlined_call_operand.vmem [shape: bf16[32,8], index: 15, kind: input, shape index: {}]
  %s16 = inlined_call_operand.vmem [shape: f32[1,8], index: 16, kind: input, shape index: {}]
  %s17 = inlined_call_operand.hbm [shape: f32[8,24], index: 17, kind: output, shape index: {}]
  %s18 = sld [smem:[#allocation0]]
  $region78: #{tpu_custom_call.1} parent=0
    _
  %s20 = ssub.s32 1, %s18
  %s21 = scalar_select 0, %s20, %s18
  $region1: #{tpu_custom_call.1} parent=0
    #allocation2 [shape = 'u8[4096]{0}', space=vmem, size = 0x1000, scoped, tag = 'output window, operand 0, single buffered']
    #allocation3 [shape = 's32[1]{0}', space=sflag, size = 0x4, scoped, tag = 'scoped memory for tpu_custom_call.1']
    %22 = vsyncpa [#allocation3], 0
    // Predicated region
    $region2: #{tpu_custom_call.1} parent=1 // pred_check
      _
    $region3: #{tpu_custom_call.1} parent=1 // pred_check_branch
      %24 = sbr.rel (0) target = $region5
    $region4: #{tpu_custom_call.1} parent=1 // pred_region
      _
    $region5: #{tpu_custom_call.1} parent=1 // pred_fallthru
      _
    // Predicated region
    $region6: #{tpu_custom_call.1} parent=1 // pred_check
      _
    $region7: #{tpu_custom_call.1} parent=1 // pred_check_branch
      %26 = sbr.rel (0) target = $region9
    $region8: #{tpu_custom_call.1} parent=1 // pred_region
      _
    $region9: #{tpu_custom_call.1} parent=1 // pred_fallthru
      _
    // Predicated region
    $region10: #{tpu_custom_call.1} parent=1 // pred_check
      _
    $region11: #{tpu_custom_call.1} parent=1 // pred_check_branch
      %28 = sbr.rel (0) target = $region13
    $region12: #{tpu_custom_call.1} parent=1 // pred_region
      _
    $region13: #{tpu_custom_call.1} parent=1 // pred_fallthru
      _
    // Predicated region
    $region14: #{tpu_custom_call.1} parent=1 // pred_check
      _
    $region15: #{tpu_custom_call.1} parent=1 // pred_check_branch
      %30 = sbr.rel (0) target = $region17
    $region16: #{tpu_custom_call.1} parent=1 // pred_region
      _
    $region17: #{tpu_custom_call.1} parent=1 // pred_fallthru
      _
    // Predicated region
    $region18: #{tpu_custom_call.1} parent=1 // pred_check
      _
    $region19: #{tpu_custom_call.1} parent=1 // pred_check_branch
      %32 = sbr.rel (0) target = $region21
    $region20: #{tpu_custom_call.1} parent=1 // pred_region
      _
    $region21: #{tpu_custom_call.1} parent=1 // pred_fallthru
      _
    // Predicated region
    $region22: #{tpu_custom_call.1} parent=1 // pred_check
      _
    $region23: #{tpu_custom_call.1} parent=1 // pred_check_branch
      %34 = sbr.rel (0) target = $region25
    $region24: #{tpu_custom_call.1} parent=1 // pred_region
      _
    $region25: #{tpu_custom_call.1} parent=1 // pred_fallthru
      _
    // Predicated region
    $region26: #{tpu_custom_call.1} parent=1 // pred_check
      _
    $region27: #{tpu_custom_call.1} parent=1 // pred_check_branch
      %36 = sbr.rel (0) target = $region29
    $region28: #{tpu_custom_call.1} parent=1 // pred_region
      _
    $region29: #{tpu_custom_call.1} parent=1 // pred_fallthru
      _
    // Predicated region
    $region30: #{tpu_custom_call.1} parent=1 // pred_check
      _
    $region31: #{tpu_custom_call.1} parent=1 // pred_check_branch
      %38 = sbr.rel (0) target = $region33
    $region32: #{tpu_custom_call.1} parent=1 // pred_region
      _
    $region33: #{tpu_custom_call.1} parent=1 // pred_fallthru
      _
    // Predicated region
    $region34: #{tpu_custom_call.1} parent=1 // pred_check
      _
    $region35: #{tpu_custom_call.1} parent=1 // pred_check_branch
      %40 = sbr.rel (0) target = $region37
    $region36: #{tpu_custom_call.1} parent=1 // pred_region
      _
    $region37: #{tpu_custom_call.1} parent=1 // pred_fallthru
      _
    // Predicated region
    $region38: #{tpu_custom_call.1} parent=1 // pred_check
      _
    $region39: #{tpu_custom_call.1} parent=1 // pred_check_branch
      %42 = sbr.rel (0) target = $region41
    $region40: #{tpu_custom_call.1} parent=1 // pred_region
      _
    $region41: #{tpu_custom_call.1} parent=1 // pred_fallthru
      _
    // Predicated region
    $region42: #{tpu_custom_call.1} parent=1 // pred_check
      _
    $region43: #{tpu_custom_call.1} parent=1 // pred_check_branch
      %44 = sbr.rel (0) target = $region45
    $region44: #{tpu_custom_call.1} parent=1 // pred_region
      _
    $region45: #{tpu_custom_call.1} parent=1 // pred_fallthru
      _
    // Predicated region
    $region46: #{tpu_custom_call.1} parent=1 // pred_check
      _
    $region47: #{tpu_custom_call.1} parent=1 // pred_check_branch
      %46 = sbr.rel (0) target = $region49
    $region48: #{tpu_custom_call.1} parent=1 // pred_region
      _
    $region49: #{tpu_custom_call.1} parent=1 // pred_fallthru
      _
    // Predicated region
    $region50: #{tpu_custom_call.1} parent=1 // pred_check
      _
    $region51: #{tpu_custom_call.1} parent=1 // pred_check_branch
      %48 = sbr.rel (0) target = $region53
    $region52: #{tpu_custom_call.1} parent=1 // pred_region
      _
    $region53: #{tpu_custom_call.1} parent=1 // pred_fallthru
      _
    // Predicated region
    $region54: #{tpu_custom_call.1} parent=1 // pred_check
      _
    $region55: #{tpu_custom_call.1} parent=1 // pred_check_branch
      %50 = sbr.rel (0) target = $region57
    $region56: #{tpu_custom_call.1} parent=1 // pred_region
      _
    $region57: #{tpu_custom_call.1} parent=1 // pred_fallthru
      _
    // Predicated region
    $region58: #{tpu_custom_call.1} parent=1 // pred_check
      _
    $region59: #{tpu_custom_call.1} parent=1 // pred_check_branch
      %52 = sbr.rel (0) target = $region61
    $region60: #{tpu_custom_call.1} parent=1 // pred_region
      _
    $region61: #{tpu_custom_call.1} parent=1 // pred_fallthru
      _
    // Predicated region
    $region62: #{tpu_custom_call.1} parent=1 // pred_check
      _
    $region63: #{tpu_custom_call.1} parent=1 // pred_check_branch
      %54 = sbr.rel (0) target = $region65
    $region64: #{tpu_custom_call.1} parent=1 // pred_region
      _
    $region65: #{tpu_custom_call.1} parent=1 // pred_fallthru
      _
    // Predicated region
    $region66: #{tpu_custom_call.1} parent=1 // pred_check
      _
    $region67: #{tpu_custom_call.1} parent=1 // pred_check_branch
      %56 = sbr.rel (0) target = $region69
    $region68: #{tpu_custom_call.1} parent=1 // pred_region
      _
    $region69: #{tpu_custom_call.1} parent=1 // pred_fallthru
      _
    %v58 = vld [vmem:[%s0] sm:$0xf]
    %v59 = vld [vmem:[%s1] sm:$0xf]
    %v60 = vld [vmem:[%s1 + $0x4] sm:$0xf]
    %v61 = vld [vmem:[%s2] sm:$0x1]
    %v63 = vlaneseq
    %v64 = vshrl.u32 %v63, 7
    %v65 = vsub.s32 0, %v64
    %v66 = vrot.slane %v61, %v65
    %v70 = vunpack.c.l.b16 %v59
    %v71 = vunpack.c.l.b16 %v60
    %v72 = vpack.c.b16 %v71, %v70
    %vm74 = vcmask 130048
    %v76 = vsel %vm74, %v58, 0
    %78 = vmatprep.subr.bf16.mxu0 0
    %79 = vmatpush1.bf16.msra.mxu0 %v72
    %80 = vmatprep.subr.bf16.mxu0 0
    %81 = vmatpush1.bf16.msra.mxu0 0
    %82 = vmatprep.subr.bf16.mxu0 0
    %83 = vmatpush1.bf16.msra.mxu0 0
    %84 = vmatprep.subr.bf16.mxu0 0
    %85 = vmatpush1.bf16.msra.mxu0 0
    %86 = vmatprep.subr.bf16.mxu0 0
    %87 = vmatpush1.bf16.msra.mxu0 0
    %88 = vmatprep.subr.bf16.mxu0 0
    %89 = vmatpush1.bf16.msra.mxu0 0
    %90 = vmatprep.subr.bf16.mxu0 0
    %91 = vmatpush1.bf16.msra.mxu0 0
    %92 = vmatprep.subr.bf16.mxu0 0
    %93 = vmatpush1.bf16.msra.mxu0 0
    %94 = vmatprep.subr.bf16.mxu0 0
    %95 = vmatpush1.bf16.msra.mxu0 0
    %96 = vmatprep.subr.bf16.mxu0 0
    %97 = vmatpush1.bf16.msra.mxu0 0
    %98 = vmatprep.subr.bf16.mxu0 0
    %99 = vmatpush1.bf16.msra.mxu0 0
    %100 = vmatprep.subr.bf16.mxu0 0
    %101 = vmatpush1.bf16.msra.mxu0 0
    %102 = vmatprep.subr.bf16.mxu0 0
    %103 = vmatpush1.bf16.msra.mxu0 0
    %104 = vmatprep.subr.bf16.mxu0 0
    %105 = vmatpush1.bf16.msra.mxu0 0
    %106 = vmatprep.subr.bf16.mxu0 0
    %107 = vmatpush1.bf16.msra.mxu0 0
    %108 = vmatprep.subr.bf16.mxu0 0
    %109 = vmatpush1.bf16.msra.mxu0 0
    %110 = vmatprep.mubr.bf16.mxu0 0
    %111 = vmatmul.mubr.bf16.gmra.mrb[0].mxu0 %v76
    %v112 = vpop.f32.mrb[0].mxu0
    %v113 = vadd.f32 %v66, %v112
    %v114 = vpop.f32.mrb[0].mxu0
    %v115 = vpop.f32.mrb[0].mxu0
    %v116 = vpop.f32.mrb[0].mxu0
    %117 = vdwg.mxu0
    %v118 = vmax.f32 %v113, 0.0
    %v119 = vpack.c.bf16 %v118, %v118
    %v120 = vld [vmem:[%s3] sm:$0xf]
    %v121 = vld [vmem:[%s3 + $0x4] sm:$0xf]
    %v122 = vld [vmem:[%s3 + $0x8] sm:$0xf]
    %v123 = vld [vmem:[%s3 + $0xc] sm:$0xf]
    %v124 = vld [vmem:[%s4] sm:$0x1]
    %v126 = vlaneseq
    %v127 = vshrl.u32 %v126, 7
    %v128 = vsub.s32 0, %v127
    %v129 = vrot.slane %v124, %v128
    %v135 = vunpack.c.l.b16 %v120
    %v136 = vunpack.c.l.b16 %v121
    %v137 = vunpack.c.l.b16 %v122
    %v138 = vunpack.c.l.b16 %v123
    %v139 = vpack.c.b16 %v136, %v135
    %v140 = vpack.c.b16 %v138, %v137
    %vm143 = vcmask 261120
    %v145 = vsel %vm143, %v119, 0
    %147 = vmatprep.subr.bf16.mxu0 0
    %148 = vmatpush1.bf16.msra.mxu0 %v139
    %149 = vmatprep.subr.bf16.mxu0 0
    %150 = vmatpush1.bf16.msra.mxu0 %v140
    %151 = vmatprep.subr.bf16.mxu0 0
    %152 = vmatpush1.bf16.msra.mxu0 0
    %153 = vmatprep.subr.bf16.mxu0 0
    %154 = vmatpush1.bf16.msra.mxu0 0
    %155 = vmatprep.subr.bf16.mxu0 0
    %156 = vmatpush1.bf16.msra.mxu0 0
    %157 = vmatprep.subr.bf16.mxu0 0
    %158 = vmatpush1.bf16.msra.mxu0 0
    %159 = vmatprep.subr.bf16.mxu0 0
    %160 = vmatpush1.bf16.msra.mxu0 0
    %161 = vmatprep.subr.bf16.mxu0 0
    %162 = vmatpush1.bf16.msra.mxu0 0
    %163 = vmatprep.subr.bf16.mxu0 0
    %164 = vmatpush1.bf16.msra.mxu0 0
    %165 = vmatprep.subr.bf16.mxu0 0
    %166 = vmatpush1.bf16.msra.mxu0 0
    %167 = vmatprep.subr.bf16.mxu0 0
    %168 = vmatpush1.bf16.msra.mxu0 0
    %169 = vmatprep.subr.bf16.mxu0 0
    %170 = vmatpush1.bf16.msra.mxu0 0
    %171 = vmatprep.subr.bf16.mxu0 0
    %172 = vmatpush1.bf16.msra.mxu0 0
    %173 = vmatprep.subr.bf16.mxu0 0
    %174 = vmatpush1.bf16.msra.mxu0 0
    %175 = vmatprep.subr.bf16.mxu0 0
    %176 = vmatpush1.bf16.msra.mxu0 0
    %177 = vmatprep.subr.bf16.mxu0 0
    %178 = vmatpush1.bf16.msra.mxu0 0
    %179 = vmatprep.mubr.bf16.mxu0 0
    %180 = vmatmul.mubr.bf16.gmra.mrb[0].mxu0 %v145
    %v181 = vpop.f32.mrb[0].mxu0
    %v182 = vadd.f32 %v129, %v181
    %v183 = vpop.f32.mrb[0].mxu0
    %v184 = vpop.f32.mrb[0].mxu0
    %v185 = vpop.f32.mrb[0].mxu0
    %186 = vdwg.mxu0
    %v187 = vmax.f32 %v182, 0.0
    %v188 = vpack.c.bf16 %v187, %v187
    %v189 = vld [vmem:[%s5] sm:$0xf]
    %v190 = vld [vmem:[%s5 + $0x4] sm:$0xf]
    %v191 = vld [vmem:[%s5 + $0x8] sm:$0xf]
    %v192 = vld [vmem:[%s5 + $0xc] sm:$0xf]
    %v193 = vld [vmem:[%s6] sm:$0x1]
    %v195 = vlaneseq
    %v196 = vshrl.u32 %v195, 7
    %v197 = vsub.s32 0, %v196
    %v198 = vrot.slane %v193, %v197
    %v204 = vunpack.c.l.b16 %v189
    %v205 = vunpack.c.l.b16 %v190
    %v206 = vunpack.c.l.b16 %v191
    %v207 = vunpack.c.l.b16 %v192
    %v208 = vpack.c.b16 %v205, %v204
    %v209 = vpack.c.b16 %v207, %v206
    %v213 = vsel %vm143, %v188, 0
    %215 = vmatprep.subr.bf16.mxu0 0
    %216 = vmatpush1.bf16.msra.mxu0 %v208
    %217 = vmatprep.subr.bf16.mxu0 0
    %218 = vmatpush1.bf16.msra.mxu0 %v209
    %219 = vmatprep.subr.bf16.mxu0 0
    %220 = vmatpush1.bf16.msra.mxu0 0
    %221 = vmatprep.subr.bf16.mxu0 0
    %222 = vmatpush1.bf16.msra.mxu0 0
    %223 = vmatprep.subr.bf16.mxu0 0
    %224 = vmatpush1.bf16.msra.mxu0 0
    %225 = vmatprep.subr.bf16.mxu0 0
    %226 = vmatpush1.bf16.msra.mxu0 0
    %227 = vmatprep.subr.bf16.mxu0 0
    %228 = vmatpush1.bf16.msra.mxu0 0
    %229 = vmatprep.subr.bf16.mxu0 0
    %230 = vmatpush1.bf16.msra.mxu0 0
    %231 = vmatprep.subr.bf16.mxu0 0
    %232 = vmatpush1.bf16.msra.mxu0 0
    %233 = vmatprep.subr.bf16.mxu0 0
    %234 = vmatpush1.bf16.msra.mxu0 0
    %235 = vmatprep.subr.bf16.mxu0 0
    %236 = vmatpush1.bf16.msra.mxu0 0
    %237 = vmatprep.subr.bf16.mxu0 0
    %238 = vmatpush1.bf16.msra.mxu0 0
    %239 = vmatprep.subr.bf16.mxu0 0
    %240 = vmatpush1.bf16.msra.mxu0 0
    %241 = vmatprep.subr.bf16.mxu0 0
    %242 = vmatpush1.bf16.msra.mxu0 0
    %243 = vmatprep.subr.bf16.mxu0 0
    %244 = vmatpush1.bf16.msra.mxu0 0
    %245 = vmatprep.subr.bf16.mxu0 0
    %246 = vmatpush1.bf16.msra.mxu0 0
    %247 = vmatprep.mubr.bf16.mxu0 0
    %248 = vmatmul.mubr.bf16.gmra.mrb[0].mxu0 %v213
    %v249 = vpop.f32.mrb[0].mxu0
    %v250 = vadd.f32 %v198, %v249
    %v251 = vpop.f32.mrb[0].mxu0
    %v252 = vpop.f32.mrb[0].mxu0
    %v253 = vpop.f32.mrb[0].mxu0
    %254 = vdwg.mxu0
    %v255 = vmax.f32 %v250, 0.0
    %v256 = vpack.c.bf16 %v255, %v255
    %v257 = vld [vmem:[%s7] sm:$0xf]
    %v258 = vld [vmem:[%s7 + $0x4] sm:$0xf]
    %v259 = vld [vmem:[%s7 + $0x8] sm:$0xf]
    %v260 = vld [vmem:[%s7 + $0xc] sm:$0xf]
    %v261 = vld [vmem:[%s8] sm:$0x1]
    %v263 = vlaneseq
    %v264 = vshrl.u32 %v263, 7
    %v265 = vsub.s32 0, %v264
    %v266 = vrot.slane %v261, %v265
    %v272 = vunpack.c.l.b16 %v257
    %v273 = vunpack.c.l.b16 %v258
    %v274 = vunpack.c.l.b16 %v259
    %v275 = vunpack.c.l.b16 %v260
    %v276 = vpack.c.b16 %v273, %v272
    %v277 = vpack.c.b16 %v275, %v274
    %v281 = vsel %vm143, %v256, 0
    %283 = vmatprep.subr.bf16.mxu0 0
    %284 = vmatpush1.bf16.msra.mxu0 %v276
    %285 = vmatprep.subr.bf16.mxu0 0
    %286 = vmatpush1.bf16.msra.mxu0 %v277
    %287 = vmatprep.subr.bf16.mxu0 0
    %288 = vmatpush1.bf16.msra.mxu0 0
    %289 = vmatprep.subr.bf16.mxu0 0
    %290 = vmatpush1.bf16.msra.mxu0 0
    %291 = vmatprep.subr.bf16.mxu0 0
    %292 = vmatpush1.bf16.msra.mxu0 0
    %293 = vmatprep.subr.bf16.mxu0 0
    %294 = vmatpush1.bf16.msra.mxu0 0
    %295 = vmatprep.subr.bf16.mxu0 0
    %296 = vmatpush1.bf16.msra.mxu0 0
    %297 = vmatprep.subr.bf16.mxu0 0
    %298 = vmatpush1.bf16.msra.mxu0 0
    %299 = vmatprep.subr.bf16.mxu0 0
    %300 = vmatpush1.bf16.msra.mxu0 0
    %301 = vmatprep.subr.bf16.mxu0 0
    %302 = vmatpush1.bf16.msra.mxu0 0
    %303 = vmatprep.subr.bf16.mxu0 0
    %304 = vmatpush1.bf16.msra.mxu0 0
    %305 = vmatprep.subr.bf16.mxu0 0
    %306 = vmatpush1.bf16.msra.mxu0 0
    %307 = vmatprep.subr.bf16.mxu0 0
    %308 = vmatpush1.bf16.msra.mxu0 0
    %309 = vmatprep.subr.bf16.mxu0 0
    %310 = vmatpush1.bf16.msra.mxu0 0
    %311 = vmatprep.subr.bf16.mxu0 0
    %312 = vmatpush1.bf16.msra.mxu0 0
    %313 = vmatprep.subr.bf16.mxu0 0
    %314 = vmatpush1.bf16.msra.mxu0 0
    %315 = vmatprep.mubr.bf16.mxu0 0
    %316 = vmatmul.mubr.bf16.gmra.mrb[0].mxu0 %v281
    %v317 = vpop.f32.mrb[0].mxu0
    %v318 = vadd.f32 %v266, %v317
    %v319 = vpop.f32.mrb[0].mxu0
    %v320 = vpop.f32.mrb[0].mxu0
    %v321 = vpop.f32.mrb[0].mxu0
    %322 = vdwg.mxu0
    %v323 = vmax.f32 %v318, 0.0
    %v324 = vpack.c.bf16 %v323, %v323
    %v325 = vld [vmem:[%s9] sm:$0xf]
    %v326 = vld [vmem:[%s9 + $0x4] sm:$0xf]
    %v327 = vld [vmem:[%s9 + $0x8] sm:$0xf]
    %v328 = vld [vmem:[%s9 + $0xc] sm:$0xf]
    %v329 = vld [vmem:[%s10] sm:$0x1]
    %v331 = vlaneseq
    %v332 = vshrl.u32 %v331, 7
    %v333 = vsub.s32 0, %v332
    %v334 = vrot.slane %v329, %v333
    %v340 = vunpack.c.l.b16 %v325
    %v341 = vunpack.c.l.b16 %v326
    %v342 = vunpack.c.l.b16 %v327
    %v343 = vunpack.c.l.b16 %v328
    %v344 = vpack.c.b16 %v341, %v340
    %v345 = vpack.c.b16 %v343, %v342
    %v349 = vsel %vm143, %v324, 0
    %351 = vmatprep.subr.bf16.mxu0 0
    %352 = vmatpush1.bf16.msra.mxu0 %v344
    %353 = vmatprep.subr.bf16.mxu0 0
    %354 = vmatpush1.bf16.msra.mxu0 %v345
    %355 = vmatprep.subr.bf16.mxu0 0
    %356 = vmatpush1.bf16.msra.mxu0 0
    %357 = vmatprep.subr.bf16.mxu0 0
    %358 = vmatpush1.bf16.msra.mxu0 0
    %359 = vmatprep.subr.bf16.mxu0 0
    %360 = vmatpush1.bf16.msra.mxu0 0
    %361 = vmatprep.subr.bf16.mxu0 0
    %362 = vmatpush1.bf16.msra.mxu0 0
    %363 = vmatprep.subr.bf16.mxu0 0
    %364 = vmatpush1.bf16.msra.mxu0 0
    %365 = vmatprep.subr.bf16.mxu0 0
    %366 = vmatpush1.bf16.msra.mxu0 0
    %367 = vmatprep.subr.bf16.mxu0 0
    %368 = vmatpush1.bf16.msra.mxu0 0
    %369 = vmatprep.subr.bf16.mxu0 0
    %370 = vmatpush1.bf16.msra.mxu0 0
    %371 = vmatprep.subr.bf16.mxu0 0
    %372 = vmatpush1.bf16.msra.mxu0 0
    %373 = vmatprep.subr.bf16.mxu0 0
    %374 = vmatpush1.bf16.msra.mxu0 0
    %375 = vmatprep.subr.bf16.mxu0 0
    %376 = vmatpush1.bf16.msra.mxu0 0
    %377 = vmatprep.subr.bf16.mxu0 0
    %378 = vmatpush1.bf16.msra.mxu0 0
    %379 = vmatprep.subr.bf16.mxu0 0
    %380 = vmatpush1.bf16.msra.mxu0 0
    %381 = vmatprep.subr.bf16.mxu0 0
    %382 = vmatpush1.bf16.msra.mxu0 0
    %383 = vmatprep.mubr.bf16.mxu0 0
    %384 = vmatmul.mubr.bf16.gmra.mrb[0].mxu0 %v349
    %v385 = vpop.f32.mrb[0].mxu0
    %v386 = vadd.f32 %v334, %v385
    %v387 = vpop.f32.mrb[0].mxu0
    %v388 = vpop.f32.mrb[0].mxu0
    %v389 = vpop.f32.mrb[0].mxu0
    %390 = vdwg.mxu0
    %v391 = vmax.f32 %v386, 0.0
    %v392 = vpack.c.bf16 %v391, %v391
    %v393 = vld [vmem:[%s11] sm:$0xf]
    %v394 = vld [vmem:[%s11 + $0x4] sm:$0xf]
    %v395 = vld [vmem:[%s11 + $0x8] sm:$0xf]
    %v396 = vld [vmem:[%s11 + $0xc] sm:$0xf]
    %v397 = vld [vmem:[%s11 + $0x10] sm:$0xf]
    %v398 = vld [vmem:[%s11 + $0x14] sm:$0xf]
    %v399 = vld [vmem:[%s11 + $0x18] sm:$0xf]
    %v400 = vld [vmem:[%s11 + $0x1c] sm:$0xf]
    %v401 = vld [vmem:[%s11 + $0x20] sm:$0xf]
    %v402 = vld [vmem:[%s11 + $0x24] sm:$0xf]
    %v403 = vld [vmem:[%s11 + $0x28] sm:$0xf]
    %v404 = vld [vmem:[%s11 + $0x2c] sm:$0xf]
    %v405 = vld [vmem:[%s11 + $0x30] sm:$0xf]
    %v406 = vld [vmem:[%s11 + $0x34] sm:$0xf]
    %v407 = vld [vmem:[%s11 + $0x38] sm:$0xf]
    %v408 = vld [vmem:[%s11 + $0x3c] sm:$0xf]
    %v409 = vld [vmem:[%s12] sm:$0x1]
    %v411 = vlaneseq
    %v412 = vshrl.u32 %v411, 7
    %v413 = vsub.s32 0, %v412
    %v414 = vrot.slane %v409, %v413
    %v432 = vunpack.c.l.b16 %v393
    %v433 = vunpack.c.l.b16 %v394
    %v434 = vunpack.c.l.b16 %v395
    %v435 = vunpack.c.l.b16 %v396
    %v436 = vunpack.c.l.b16 %v397
    %v437 = vunpack.c.l.b16 %v398
    %v438 = vunpack.c.l.b16 %v399
    %v439 = vunpack.c.l.b16 %v400
    %v440 = vunpack.c.l.b16 %v401
    %v441 = vunpack.c.l.b16 %v402
    %v442 = vunpack.c.l.b16 %v403
    %v443 = vunpack.c.l.b16 %v404
    %v444 = vunpack.c.l.b16 %v405
    %v445 = vunpack.c.l.b16 %v406
    %v446 = vunpack.c.l.b16 %v407
    %v447 = vunpack.c.l.b16 %v408
    %v448 = vpack.c.b16 %v433, %v432
    %v449 = vpack.c.b16 %v435, %v434
    %v450 = vpack.c.b16 %v437, %v436
    %v451 = vpack.c.b16 %v439, %v438
    %v452 = vpack.c.b16 %v441, %v440
    %v453 = vpack.c.b16 %v443, %v442
    %v454 = vpack.c.b16 %v445, %v444
    %v455 = vpack.c.b16 %v447, %v446
    %464 = vmatprep.subr.bf16.mxu0 0
    %465 = vmatpush1.bf16.msra.mxu0 %v448
    %466 = vmatprep.subr.bf16.mxu0 0
    %467 = vmatpush1.bf16.msra.mxu0 %v449
    %468 = vmatprep.subr.bf16.mxu0 0
    %469 = vmatpush1.bf16.msra.mxu0 %v450
    %470 = vmatprep.subr.bf16.mxu0 0
    %471 = vmatpush1.bf16.msra.mxu0 %v451
    %472 = vmatprep.subr.bf16.mxu0 0
    %473 = vmatpush1.bf16.msra.mxu0 %v452
    %474 = vmatprep.subr.bf16.mxu0 0
    %475 = vmatpush1.bf16.msra.mxu0 %v453
    %476 = vmatprep.subr.bf16.mxu0 0
    %477 = vmatpush1.bf16.msra.mxu0 %v454
    %478 = vmatprep.subr.bf16.mxu0 0
    %479 = vmatpush1.bf16.msra.mxu0 %v455
    %480 = vmatprep.subr.bf16.mxu0 0
    %481 = vmatpush1.bf16.msra.mxu0 0
    %482 = vmatprep.subr.bf16.mxu0 0
    %483 = vmatpush1.bf16.msra.mxu0 0
    %484 = vmatprep.subr.bf16.mxu0 0
    %485 = vmatpush1.bf16.msra.mxu0 0
    %486 = vmatprep.subr.bf16.mxu0 0
    %487 = vmatpush1.bf16.msra.mxu0 0
    %488 = vmatprep.subr.bf16.mxu0 0
    %489 = vmatpush1.bf16.msra.mxu0 0
    %490 = vmatprep.subr.bf16.mxu0 0
    %491 = vmatpush1.bf16.msra.mxu0 0
    %492 = vmatprep.subr.bf16.mxu0 0
    %493 = vmatpush1.bf16.msra.mxu0 0
    %494 = vmatprep.subr.bf16.mxu0 0
    %495 = vmatpush1.bf16.msra.mxu0 0
    %496 = vmatprep.mubr.bf16.mxu0 0
    %497 = vmatmul.mubr.bf16.gmra.mrb[0].mxu0 %v392
    %v498 = vpop.f32.mrb[0].mxu0
    %v499 = vadd.f32 %v414, %v498
    %v500 = vpop.f32.mrb[0].mxu0
    %v501 = vpop.f32.mrb[0].mxu0
    %v502 = vpop.f32.mrb[0].mxu0
    %503 = vdwg.mxu0
    %v504 = vmax.f32 %v499, 0.0
    %v505 = vpack.c.bf16 %v504, %v504
    %v506 = vld [vmem:[%s13] sm:$0xf]
    %v507 = vld [vmem:[%s13 + $0x4] sm:$0xf]
    %v508 = vld [vmem:[%s13 + $0x8] sm:$0xf]
    %v509 = vld [vmem:[%s13 + $0xc] sm:$0xf]
    %v510 = vld [vmem:[%s14] sm:$0x1]
    %v512 = vlaneseq
    %v513 = vshrl.u32 %v512, 7
    %v514 = vsub.s32 0, %v513
    %v515 = vrot.slane %v510, %v514
    %v521 = vunpack.c.l.b16 %v506
    %v522 = vunpack.c.l.b16 %v507
    %v523 = vunpack.c.l.b16 %v508
    %v524 = vunpack.c.l.b16 %v509
    %v525 = vpack.c.b16 %v522, %v521
    %v526 = vpack.c.b16 %v524, %v523
    %v530 = vsel %vm143, %v505, 0
    %532 = vmatprep.subr.bf16.mxu0 0
    %533 = vmatpush1.bf16.msra.mxu0 %v525
    %534 = vmatprep.subr.bf16.mxu0 0
    %535 = vmatpush1.bf16.msra.mxu0 %v526
    %536 = vmatprep.subr.bf16.mxu0 0
    %537 = vmatpush1.bf16.msra.mxu0 0
    %538 = vmatprep.subr.bf16.mxu0 0
    %539 = vmatpush1.bf16.msra.mxu0 0
    %540 = vmatprep.subr.bf16.mxu0 0
    %541 = vmatpush1.bf16.msra.mxu0 0
    %542 = vmatprep.subr.bf16.mxu0 0
    %543 = vmatpush1.bf16.msra.mxu0 0
    %544 = vmatprep.subr.bf16.mxu0 0
    %545 = vmatpush1.bf16.msra.mxu0 0
    %546 = vmatprep.subr.bf16.mxu0 0
    %547 = vmatpush1.bf16.msra.mxu0 0
    %548 = vmatprep.subr.bf16.mxu0 0
    %549 = vmatpush1.bf16.msra.mxu0 0
    %550 = vmatprep.subr.bf16.mxu0 0
    %551 = vmatpush1.bf16.msra.mxu0 0
    %552 = vmatprep.subr.bf16.mxu0 0
    %553 = vmatpush1.bf16.msra.mxu0 0
    %554 = vmatprep.subr.bf16.mxu0 0
    %555 = vmatpush1.bf16.msra.mxu0 0
    %556 = vmatprep.subr.bf16.mxu0 0
    %557 = vmatpush1.bf16.msra.mxu0 0
    %558 = vmatprep.subr.bf16.mxu0 0
    %559 = vmatpush1.bf16.msra.mxu0 0
    %560 = vmatprep.subr.bf16.mxu0 0
    %561 = vmatpush1.bf16.msra.mxu0 0
    %562 = vmatprep.subr.bf16.mxu0 0
    %563 = vmatpush1.bf16.msra.mxu0 0
    %564 = vmatprep.mubr.bf16.mxu0 0
    %565 = vmatmul.mubr.bf16.gmra.mrb[0].mxu0 %v530
    %v566 = vpop.f32.mrb[0].mxu0
    %v567 = vadd.f32 %v515, %v566
    %v568 = vpop.f32.mrb[0].mxu0
    %v569 = vpop.f32.mrb[0].mxu0
    %v570 = vpop.f32.mrb[0].mxu0
    %571 = vdwg.mxu0
    %v572 = vld [vmem:[%s15] sm:$0xf]
    %v573 = vld [vmem:[%s15 + $0x4] sm:$0xf]
    %v574 = vld [vmem:[%s15 + $0x8] sm:$0xf]
    %v575 = vld [vmem:[%s15 + $0xc] sm:$0xf]
    %v576 = vld [vmem:[%s16] sm:$0x1]
    %v578 = vlaneseq
    %v579 = vshrl.u32 %v578, 7
    %v580 = vsub.s32 0, %v579
    %v581 = vrot.slane %v576, %v580
    %v587 = vunpack.c.l.b16 %v572
    %v588 = vunpack.c.l.b16 %v573
    %v589 = vunpack.c.l.b16 %v574
    %v590 = vunpack.c.l.b16 %v575
    %v591 = vpack.c.b16 %v588, %v587
    %v592 = vpack.c.b16 %v590, %v589
    %595 = vmatprep.subr.bf16.mxu0 0
    %596 = vmatpush1.bf16.msra.mxu0 %v591
    %597 = vmatprep.subr.bf16.mxu0 0
    %598 = vmatpush1.bf16.msra.mxu0 %v592
    %599 = vmatprep.subr.bf16.mxu0 0
    %600 = vmatpush1.bf16.msra.mxu0 0
    %601 = vmatprep.subr.bf16.mxu0 0
    %602 = vmatpush1.bf16.msra.mxu0 0
    %603 = vmatprep.subr.bf16.mxu0 0
    %604 = vmatpush1.bf16.msra.mxu0 0
    %605 = vmatprep.subr.bf16.mxu0 0
    %606 = vmatpush1.bf16.msra.mxu0 0
    %607 = vmatprep.subr.bf16.mxu0 0
    %608 = vmatpush1.bf16.msra.mxu0 0
    %609 = vmatprep.subr.bf16.mxu0 0
    %610 = vmatpush1.bf16.msra.mxu0 0
    %611 = vmatprep.subr.bf16.mxu0 0
    %612 = vmatpush1.bf16.msra.mxu0 0
    %613 = vmatprep.subr.bf16.mxu0 0
    %614 = vmatpush1.bf16.msra.mxu0 0
    %615 = vmatprep.subr.bf16.mxu0 0
    %616 = vmatpush1.bf16.msra.mxu0 0
    %617 = vmatprep.subr.bf16.mxu0 0
    %618 = vmatpush1.bf16.msra.mxu0 0
    %619 = vmatprep.subr.bf16.mxu0 0
    %620 = vmatpush1.bf16.msra.mxu0 0
    %621 = vmatprep.subr.bf16.mxu0 0
    %622 = vmatpush1.bf16.msra.mxu0 0
    %623 = vmatprep.subr.bf16.mxu0 0
    %624 = vmatpush1.bf16.msra.mxu0 0
    %625 = vmatprep.subr.bf16.mxu0 0
    %626 = vmatpush1.bf16.msra.mxu0 0
    %627 = vmatprep.mubr.bf16.mxu0 0
    %628 = vmatmul.mubr.bf16.gmra.mrb[0].mxu0 %v349
    %v629 = vpop.f32.mrb[0].mxu0
    %v630 = vadd.f32 %v581, %v629
    %v631 = vpop.f32.mrb[0].mxu0
    %v632 = vpop.f32.mrb[0].mxu0
    %v633 = vpop.f32.mrb[0].mxu0
    %634 = vdwg.mxu0
    %636 = vrot.lane.b32.xlu0 %v630, 16
    %v637 = vpop.permute.xlu0 %636
    %v639 = vsel %vm74, %v567, %v637
    %vm640 = vcmask 195584
    %641 = vst.msk [vmem:[#allocation2] sm:$0xff] %vm640, %v639
    // Predicated region
    $region70: #{tpu_custom_call.1} parent=1 // pred_check
      _
    $region71: #{tpu_custom_call.1} parent=1 // pred_check_branch
      %643 = sbr.rel (0) target = $region73
    $region72: #{tpu_custom_call.1} parent=1 // pred_region
      %s645 = ssub.s32 128, 128
      %646 = vsyncadd [#allocation3], %s645
      %s648 = sshll.u32 [#allocation2], 4
      %s649 = int_to_ptr.vmem [resolvable:$true] %s648
      %651 = dma.vmem_to_hbm [thread:$0]  %s649, 128, %s17, [#allocation3]
    $region73: #{tpu_custom_call.1} parent=1 // pred_fallthru
      _
    // Predicated region
    $region74: #{tpu_custom_call.1} parent=1 // pred_check
      _
    $region75: #{tpu_custom_call.1} parent=1 // pred_check_branch
      %653 = sbr.rel (0) target = $region77
    $region76: #{tpu_custom_call.1} parent=1 // pred_region
      %654 = dma.done [#allocation3], 128
    $region77: #{tpu_custom_call.1} parent=1 // pred_fallthru
      _
    %655 = vsyncpa [#allocation3], 1

// kernel: tpu_custom_call.1
$region0: #{tpu_custom_call.1}
  #allocation0 [shape = 'u32[]', space=smem, size = 0x4, offset = 0x4, fixed_abs, tag = 'smem constant byte address 0x4 - core index']
  #allocation1 [shape = 'u32[144,128]{1,0:T(1,128)}', space=vmem, size = 0x12000, scoped, tag = 'internal scratch']
  %s0 = inlined_call_operand.vmem [shape: bf16[8,16], index: 0, kind: input, shape index: {}]
  %s1 = inlined_call_operand.vmem [shape: bf16[16,32], index: 1, kind: input, shape index: {}]
  %s2 = inlined_call_operand.vmem [shape: f32[1,32], index: 2, kind: input, shape index: {}]
  %s3 = inlined_call_operand.vmem [shape: bf16[32,32], index: 3, kind: input, shape index: {}]
  %s4 = inlined_call_operand.vmem [shape: f32[1,32], index: 4, kind: input, shape index: {}]
  %s5 = inlined_call_operand.vmem [shape: bf16[32,32], index: 5, kind: input, shape index: {}]
  %s6 = inlined_call_operand.vmem [shape: f32[1,32], index: 6, kind: input, shape index: {}]
  %s7 = inlined_call_operand.vmem [shape: bf16[32,32], index: 7, kind: input, shape index: {}]
  %s8 = inlined_call_operand.vmem [shape: f32[1,32], index: 8, kind: input, shape index: {}]
  %s9 = inlined_call_operand.vmem [shape: bf16[32,128], index: 9, kind: input, shape index: {}]
  %s10 = inlined_call_operand.vmem [shape: f32[1,128], index: 10, kind: input, shape index: {}]
  %s11 = inlined_call_operand.vmem [shape: bf16[128,32], index: 11, kind: input, shape index: {}]
  %s12 = inlined_call_operand.vmem [shape: f32[1,32], index: 12, kind: input, shape index: {}]
  %s13 = inlined_call_operand.vmem [shape: bf16[32,16], index: 13, kind: input, shape index: {}]
  %s14 = inlined_call_operand.vmem [shape: f32[1,16], index: 14, kind: input, shape index: {}]
  %s15 = inlined_call_operand.vmem [shape: bf16[32,8], index: 15, kind: input, shape index: {}]
  %s16 = inlined_call_operand.vmem [shape: f32[1,8], index: 16, kind: input, shape index: {}]
  %s17 = inlined_call_operand.hbm [shape: f32[8,24], index: 17, kind: output, shape index: {}]
  %s18 = sld [smem:[#allocation0]]
  $region78: #{tpu_custom_call.1} parent=0
    _
  %s20 = ssub.s32 1, %s18
  %s21 = scalar_select 0, %s20, %s18
  $region1: #{tpu_custom_call.1} parent=0
    #allocation2 [shape = 'u8[4096]{0}', space=vmem, size = 0x1000, scoped, tag = 'output window, operand 0, single buffered']
    #allocation3 [shape = 's32[1]{0}', space=sflag, size = 0x4, scoped, tag = 'scoped memory for tpu_custom_call.1']
    %22 = vsyncpa [#allocation3], 0
    // Predicated region
    $region2: #{tpu_custom_call.1} parent=1 // pred_check
      _
    $region3: #{tpu_custom_call.1} parent=1 // pred_check_branch
      %24 = sbr.rel (0) target = $region5
    $region4: #{tpu_custom_call.1} parent=1 // pred_region
      _
    $region5: #{tpu_custom_call.1} parent=1 // pred_fallthru
      _
    // Predicated region
    $region6: #{tpu_custom_call.1} parent=1 // pred_check
      _
    $region7: #{tpu_custom_call.1} parent=1 // pred_check_branch
      %26 = sbr.rel (0) target = $region9
    $region8: #{tpu_custom_call.1} parent=1 // pred_region
      _
    $region9: #{tpu_custom_call.1} parent=1 // pred_fallthru
      _
    // Predicated region
    $region10: #{tpu_custom_call.1} parent=1 // pred_check
      _
    $region11: #{tpu_custom_call.1} parent=1 // pred_check_branch
      %28 = sbr.rel (0) target = $region13
    $region12: #{tpu_custom_call.1} parent=1 // pred_region
      _
    $region13: #{tpu_custom_call.1} parent=1 // pred_fallthru
      _
    // Predicated region
    $region14: #{tpu_custom_call.1} parent=1 // pred_check
      _
    $region15: #{tpu_custom_call.1} parent=1 // pred_check_branch
      %30 = sbr.rel (0) target = $region17
    $region16: #{tpu_custom_call.1} parent=1 // pred_region
      _
    $region17: #{tpu_custom_call.1} parent=1 // pred_fallthru
      _
    // Predicated region
    $region18: #{tpu_custom_call.1} parent=1 // pred_check
      _
    $region19: #{tpu_custom_call.1} parent=1 // pred_check_branch
      %32 = sbr.rel (0) target = $region21
    $region20: #{tpu_custom_call.1} parent=1 // pred_region
      _
    $region21: #{tpu_custom_call.1} parent=1 // pred_fallthru
      _
    // Predicated region
    $region22: #{tpu_custom_call.1} parent=1 // pred_check
      _
    $region23: #{tpu_custom_call.1} parent=1 // pred_check_branch
      %34 = sbr.rel (0) target = $region25
    $region24: #{tpu_custom_call.1} parent=1 // pred_region
      _
    $region25: #{tpu_custom_call.1} parent=1 // pred_fallthru
      _
    // Predicated region
    $region26: #{tpu_custom_call.1} parent=1 // pred_check
      _
    $region27: #{tpu_custom_call.1} parent=1 // pred_check_branch
      %36 = sbr.rel (0) target = $region29
    $region28: #{tpu_custom_call.1} parent=1 // pred_region
      _
    $region29: #{tpu_custom_call.1} parent=1 // pred_fallthru
      _
    // Predicated region
    $region30: #{tpu_custom_call.1} parent=1 // pred_check
      _
    $region31: #{tpu_custom_call.1} parent=1 // pred_check_branch
      %38 = sbr.rel (0) target = $region33
    $region32: #{tpu_custom_call.1} parent=1 // pred_region
      _
    $region33: #{tpu_custom_call.1} parent=1 // pred_fallthru
      _
    // Predicated region
    $region34: #{tpu_custom_call.1} parent=1 // pred_check
      _
    $region35: #{tpu_custom_call.1} parent=1 // pred_check_branch
      %40 = sbr.rel (0) target = $region37
    $region36: #{tpu_custom_call.1} parent=1 // pred_region
      _
    $region37: #{tpu_custom_call.1} parent=1 // pred_fallthru
      _
    // Predicated region
    $region38: #{tpu_custom_call.1} parent=1 // pred_check
      _
    $region39: #{tpu_custom_call.1} parent=1 // pred_check_branch
      %42 = sbr.rel (0) target = $region41
    $region40: #{tpu_custom_call.1} parent=1 // pred_region
      _
    $region41: #{tpu_custom_call.1} parent=1 // pred_fallthru
      _
    // Predicated region
    $region42: #{tpu_custom_call.1} parent=1 // pred_check
      _
    $region43: #{tpu_custom_call.1} parent=1 // pred_check_branch
      %44 = sbr.rel (0) target = $region45
    $region44: #{tpu_custom_call.1} parent=1 // pred_region
      _
    $region45: #{tpu_custom_call.1} parent=1 // pred_fallthru
      _
    // Predicated region
    $region46: #{tpu_custom_call.1} parent=1 // pred_check
      _
    $region47: #{tpu_custom_call.1} parent=1 // pred_check_branch
      %46 = sbr.rel (0) target = $region49
    $region48: #{tpu_custom_call.1} parent=1 // pred_region
      _
    $region49: #{tpu_custom_call.1} parent=1 // pred_fallthru
      _
    // Predicated region
    $region50: #{tpu_custom_call.1} parent=1 // pred_check
      _
    $region51: #{tpu_custom_call.1} parent=1 // pred_check_branch
      %48 = sbr.rel (0) target = $region53
    $region52: #{tpu_custom_call.1} parent=1 // pred_region
      _
    $region53: #{tpu_custom_call.1} parent=1 // pred_fallthru
      _
    // Predicated region
    $region54: #{tpu_custom_call.1} parent=1 // pred_check
      _
    $region55: #{tpu_custom_call.1} parent=1 // pred_check_branch
      %50 = sbr.rel (0) target = $region57
    $region56: #{tpu_custom_call.1} parent=1 // pred_region
      _
    $region57: #{tpu_custom_call.1} parent=1 // pred_fallthru
      _
    // Predicated region
    $region58: #{tpu_custom_call.1} parent=1 // pred_check
      _
    $region59: #{tpu_custom_call.1} parent=1 // pred_check_branch
      %52 = sbr.rel (0) target = $region61
    $region60: #{tpu_custom_call.1} parent=1 // pred_region
      _
    $region61: #{tpu_custom_call.1} parent=1 // pred_fallthru
      _
    // Predicated region
    $region62: #{tpu_custom_call.1} parent=1 // pred_check
      _
    $region63: #{tpu_custom_call.1} parent=1 // pred_check_branch
      %54 = sbr.rel (0) target = $region65
    $region64: #{tpu_custom_call.1} parent=1 // pred_region
      _
    $region65: #{tpu_custom_call.1} parent=1 // pred_fallthru
      _
    // Predicated region
    $region66: #{tpu_custom_call.1} parent=1 // pred_check
      _
    $region67: #{tpu_custom_call.1} parent=1 // pred_check_branch
      %56 = sbr.rel (0) target = $region69
    $region68: #{tpu_custom_call.1} parent=1 // pred_region
      _
    $region69: #{tpu_custom_call.1} parent=1 // pred_fallthru
      _
    %v58 = vld [vmem:[%s0] sm:$0xf]
    %v59 = vld [vmem:[%s1] sm:$0xf]
    %v60 = vld [vmem:[%s1 + $0x4] sm:$0xf]
    %v61 = vld [vmem:[%s2] sm:$0x1]
    %v63 = vlaneseq
    %v64 = vshrl.u32 %v63, 7
    %v65 = vsub.s32 0, %v64
    %v66 = vrot.slane %v61, %v65
    %v70 = vunpack.c.l.b16 %v59
    %v71 = vunpack.c.l.b16 %v60
    %v72 = vpack.c.b16 %v71, %v70
    %vm74 = vcmask 130048
    %v76 = vsel %vm74, %v58, 0
    %78 = vmatprep.subr.bf16.mxu0 0
    %79 = vmatpush1.bf16.msra.mxu0 %v72
    %80 = vmatprep.subr.bf16.mxu0 0
    %81 = vmatpush1.bf16.msra.mxu0 0
    %82 = vmatprep.subr.bf16.mxu0 0
    %83 = vmatpush1.bf16.msra.mxu0 0
    %84 = vmatprep.subr.bf16.mxu0 0
    %85 = vmatpush1.bf16.msra.mxu0 0
    %86 = vmatprep.subr.bf16.mxu0 0
    %87 = vmatpush1.bf16.msra.mxu0 0
    %88 = vmatprep.subr.bf16.mxu0 0
    %89 = vmatpush1.bf16.msra.mxu0 0
    %90 = vmatprep.subr.bf16.mxu0 0
    %91 = vmatpush1.bf16.msra.mxu0 0
    %92 = vmatprep.subr.bf16.mxu0 0
    %93 = vmatpush1.bf16.msra.mxu0 0
    %94 = vmatprep.subr.bf16.mxu0 0
    %95 = vmatpush1.bf16.msra.mxu0 0
    %96 = vmatprep.subr.bf16.mxu0 0
    %97 = vmatpush1.bf16.msra.mxu0 0
    %98 = vmatprep.subr.bf16.mxu0 0
    %99 = vmatpush1.bf16.msra.mxu0 0
    %100 = vmatprep.subr.bf16.mxu0 0
    %101 = vmatpush1.bf16.msra.mxu0 0
    %102 = vmatprep.subr.bf16.mxu0 0
    %103 = vmatpush1.bf16.msra.mxu0 0
    %104 = vmatprep.subr.bf16.mxu0 0
    %105 = vmatpush1.bf16.msra.mxu0 0
    %106 = vmatprep.subr.bf16.mxu0 0
    %107 = vmatpush1.bf16.msra.mxu0 0
    %108 = vmatprep.subr.bf16.mxu0 0
    %109 = vmatpush1.bf16.msra.mxu0 0
    %110 = vmatprep.mubr.bf16.mxu0 0
    %111 = vmatmul.mubr.bf16.gmra.mrb[0].mxu0 %v76
    %v112 = vpop.f32.mrb[0].mxu0
    %v113 = vadd.f32 %v66, %v112
    %v114 = vpop.f32.mrb[0].mxu0
    %v115 = vpop.f32.mrb[0].mxu0
    %v116 = vpop.f32.mrb[0].mxu0
    %117 = vdwg.mxu0
    %v118 = vmax.f32 %v113, 0.0
    %v119 = vpack.c.bf16 %v118, %v118
    %v120 = vld [vmem:[%s3] sm:$0xf]
    %v121 = vld [vmem:[%s3 + $0x4] sm:$0xf]
    %v122 = vld [vmem:[%s3 + $0x8] sm:$0xf]
    %v123 = vld [vmem:[%s3 + $0xc] sm:$0xf]
    %v124 = vld [vmem:[%s4] sm:$0x1]
    %v126 = vlaneseq
    %v127 = vshrl.u32 %v126, 7
    %v128 = vsub.s32 0, %v127
    %v129 = vrot.slane %v124, %v128
    %v135 = vunpack.c.l.b16 %v120
    %v136 = vunpack.c.l.b16 %v121
    %v137 = vunpack.c.l.b16 %v122
    %v138 = vunpack.c.l.b16 %v123
    %v139 = vpack.c.b16 %v136, %v135
    %v140 = vpack.c.b16 %v138, %v137
    %vm143 = vcmask 261120
    %v145 = vsel %vm143, %v119, 0
    %147 = vmatprep.subr.bf16.mxu0 0
    %148 = vmatpush1.bf16.msra.mxu0 %v139
    %149 = vmatprep.subr.bf16.mxu0 0
    %150 = vmatpush1.bf16.msra.mxu0 %v140
    %151 = vmatprep.subr.bf16.mxu0 0
    %152 = vmatpush1.bf16.msra.mxu0 0
    %153 = vmatprep.subr.bf16.mxu0 0
    %154 = vmatpush1.bf16.msra.mxu0 0
    %155 = vmatprep.subr.bf16.mxu0 0
    %156 = vmatpush1.bf16.msra.mxu0 0
    %157 = vmatprep.subr.bf16.mxu0 0
    %158 = vmatpush1.bf16.msra.mxu0 0
    %159 = vmatprep.subr.bf16.mxu0 0
    %160 = vmatpush1.bf16.msra.mxu0 0
    %161 = vmatprep.subr.bf16.mxu0 0
    %162 = vmatpush1.bf16.msra.mxu0 0
    %163 = vmatprep.subr.bf16.mxu0 0
    %164 = vmatpush1.bf16.msra.mxu0 0
    %165 = vmatprep.subr.bf16.mxu0 0
    %166 = vmatpush1.bf16.msra.mxu0 0
    %167 = vmatprep.subr.bf16.mxu0 0
    %168 = vmatpush1.bf16.msra.mxu0 0
    %169 = vmatprep.subr.bf16.mxu0 0
    %170 = vmatpush1.bf16.msra.mxu0 0
    %171 = vmatprep.subr.bf16.mxu0 0
    %172 = vmatpush1.bf16.msra.mxu0 0
    %173 = vmatprep.subr.bf16.mxu0 0
    %174 = vmatpush1.bf16.msra.mxu0 0
    %175 = vmatprep.subr.bf16.mxu0 0
    %176 = vmatpush1.bf16.msra.mxu0 0
    %177 = vmatprep.subr.bf16.mxu0 0
    %178 = vmatpush1.bf16.msra.mxu0 0
    %179 = vmatprep.mubr.bf16.mxu0 0
    %180 = vmatmul.mubr.bf16.gmra.mrb[0].mxu0 %v145
    %v181 = vpop.f32.mrb[0].mxu0
    %v182 = vadd.f32 %v129, %v181
    %v183 = vpop.f32.mrb[0].mxu0
    %v184 = vpop.f32.mrb[0].mxu0
    %v185 = vpop.f32.mrb[0].mxu0
    %186 = vdwg.mxu0
    %v187 = vmax.f32 %v182, 0.0
    %v188 = vpack.c.bf16 %v187, %v187
    %v189 = vld [vmem:[%s5] sm:$0xf]
    %v190 = vld [vmem:[%s5 + $0x4] sm:$0xf]
    %v191 = vld [vmem:[%s5 + $0x8] sm:$0xf]
    %v192 = vld [vmem:[%s5 + $0xc] sm:$0xf]
    %v193 = vld [vmem:[%s6] sm:$0x1]
    %v195 = vlaneseq
    %v196 = vshrl.u32 %v195, 7
    %v197 = vsub.s32 0, %v196
    %v198 = vrot.slane %v193, %v197
    %v204 = vunpack.c.l.b16 %v189
    %v205 = vunpack.c.l.b16 %v190
    %v206 = vunpack.c.l.b16 %v191
    %v207 = vunpack.c.l.b16 %v192
    %v208 = vpack.c.b16 %v205, %v204
    %v209 = vpack.c.b16 %v207, %v206
    %v213 = vsel %vm143, %v188, 0
    %215 = vmatprep.subr.bf16.mxu0 0
    %216 = vmatpush1.bf16.msra.mxu0 %v208
    %217 = vmatprep.subr.bf16.mxu0 0
    %218 = vmatpush1.bf16.msra.mxu0 %v209
    %219 = vmatprep.subr.bf16.mxu0 0
    %220 = vmatpush1.bf16.msra.mxu0 0
    %221 = vmatprep.subr.bf16.mxu0 0
    %222 = vmatpush1.bf16.msra.mxu0 0
    %223 = vmatprep.subr.bf16.mxu0 0
    %224 = vmatpush1.bf16.msra.mxu0 0
    %225 = vmatprep.subr.bf16.mxu0 0
    %226 = vmatpush1.bf16.msra.mxu0 0
    %227 = vmatprep.subr.bf16.mxu0 0
    %228 = vmatpush1.bf16.msra.mxu0 0
    %229 = vmatprep.subr.bf16.mxu0 0
    %230 = vmatpush1.bf16.msra.mxu0 0
    %231 = vmatprep.subr.bf16.mxu0 0
    %232 = vmatpush1.bf16.msra.mxu0 0
    %233 = vmatprep.subr.bf16.mxu0 0
    %234 = vmatpush1.bf16.msra.mxu0 0
    %235 = vmatprep.subr.bf16.mxu0 0
    %236 = vmatpush1.bf16.msra.mxu0 0
    %237 = vmatprep.subr.bf16.mxu0 0
    %238 = vmatpush1.bf16.msra.mxu0 0
    %239 = vmatprep.subr.bf16.mxu0 0
    %240 = vmatpush1.bf16.msra.mxu0 0
    %241 = vmatprep.subr.bf16.mxu0 0
    %242 = vmatpush1.bf16.msra.mxu0 0
    %243 = vmatprep.subr.bf16.mxu0 0
    %244 = vmatpush1.bf16.msra.mxu0 0
    %245 = vmatprep.subr.bf16.mxu0 0
    %246 = vmatpush1.bf16.msra.mxu0 0
    %247 = vmatprep.mubr.bf16.mxu0 0
    %248 = vmatmul.mubr.bf16.gmra.mrb[0].mxu0 %v213
    %v249 = vpop.f32.mrb[0].mxu0
    %v250 = vadd.f32 %v198, %v249
    %v251 = vpop.f32.mrb[0].mxu0
    %v252 = vpop.f32.mrb[0].mxu0
    %v253 = vpop.f32.mrb[0].mxu0
    %254 = vdwg.mxu0
    %v255 = vmax.f32 %v250, 0.0
    %v256 = vpack.c.bf16 %v255, %v255
    %v257 = vld [vmem:[%s7] sm:$0xf]
    %v258 = vld [vmem:[%s7 + $0x4] sm:$0xf]
    %v259 = vld [vmem:[%s7 + $0x8] sm:$0xf]
    %v260 = vld [vmem:[%s7 + $0xc] sm:$0xf]
    %v261 = vld [vmem:[%s8] sm:$0x1]
    %v263 = vlaneseq
    %v264 = vshrl.u32 %v263, 7
    %v265 = vsub.s32 0, %v264
    %v266 = vrot.slane %v261, %v265
    %v272 = vunpack.c.l.b16 %v257
    %v273 = vunpack.c.l.b16 %v258
    %v274 = vunpack.c.l.b16 %v259
    %v275 = vunpack.c.l.b16 %v260
    %v276 = vpack.c.b16 %v273, %v272
    %v277 = vpack.c.b16 %v275, %v274
    %v281 = vsel %vm143, %v256, 0
    %283 = vmatprep.subr.bf16.mxu0 0
    %284 = vmatpush1.bf16.msra.mxu0 %v276
    %285 = vmatprep.subr.bf16.mxu0 0
    %286 = vmatpush1.bf16.msra.mxu0 %v277
    %287 = vmatprep.subr.bf16.mxu0 0
    %288 = vmatpush1.bf16.msra.mxu0 0
    %289 = vmatprep.subr.bf16.mxu0 0
    %290 = vmatpush1.bf16.msra.mxu0 0
    %291 = vmatprep.subr.bf16.mxu0 0
    %292 = vmatpush1.bf16.msra.mxu0 0
    %293 = vmatprep.subr.bf16.mxu0 0
    %294 = vmatpush1.bf16.msra.mxu0 0
    %295 = vmatprep.subr.bf16.mxu0 0
    %296 = vmatpush1.bf16.msra.mxu0 0
    %297 = vmatprep.subr.bf16.mxu0 0
    %298 = vmatpush1.bf16.msra.mxu0 0
    %299 = vmatprep.subr.bf16.mxu0 0
    %300 = vmatpush1.bf16.msra.mxu0 0
    %301 = vmatprep.subr.bf16.mxu0 0
    %302 = vmatpush1.bf16.msra.mxu0 0
    %303 = vmatprep.subr.bf16.mxu0 0
    %304 = vmatpush1.bf16.msra.mxu0 0
    %305 = vmatprep.subr.bf16.mxu0 0
    %306 = vmatpush1.bf16.msra.mxu0 0
    %307 = vmatprep.subr.bf16.mxu0 0
    %308 = vmatpush1.bf16.msra.mxu0 0
    %309 = vmatprep.subr.bf16.mxu0 0
    %310 = vmatpush1.bf16.msra.mxu0 0
    %311 = vmatprep.subr.bf16.mxu0 0
    %312 = vmatpush1.bf16.msra.mxu0 0
    %313 = vmatprep.subr.bf16.mxu0 0
    %314 = vmatpush1.bf16.msra.mxu0 0
    %315 = vmatprep.mubr.bf16.mxu0 0
    %316 = vmatmul.mubr.bf16.gmra.mrb[0].mxu0 %v281
    %v317 = vpop.f32.mrb[0].mxu0
    %v318 = vadd.f32 %v266, %v317
    %v319 = vpop.f32.mrb[0].mxu0
    %v320 = vpop.f32.mrb[0].mxu0
    %v321 = vpop.f32.mrb[0].mxu0
    %322 = vdwg.mxu0
    %v323 = vmax.f32 %v318, 0.0
    %v324 = vpack.c.bf16 %v323, %v323
    %v325 = vld [vmem:[%s9] sm:$0xf]
    %v326 = vld [vmem:[%s9 + $0x4] sm:$0xf]
    %v327 = vld [vmem:[%s9 + $0x8] sm:$0xf]
    %v328 = vld [vmem:[%s9 + $0xc] sm:$0xf]
    %v329 = vld [vmem:[%s10] sm:$0x1]
    %v331 = vlaneseq
    %v332 = vshrl.u32 %v331, 7
    %v333 = vsub.s32 0, %v332
    %v334 = vrot.slane %v329, %v333
    %v340 = vunpack.c.l.b16 %v325
    %v341 = vunpack.c.l.b16 %v326
    %v342 = vunpack.c.l.b16 %v327
    %v343 = vunpack.c.l.b16 %v328
    %v344 = vpack.c.b16 %v341, %v340
    %v345 = vpack.c.b16 %v343, %v342
    %v349 = vsel %vm143, %v324, 0
    %351 = vmatprep.subr.bf16.mxu0 0
    %352 = vmatpush1.bf16.msra.mxu0 %v344
    %353 = vmatprep.subr.bf16.mxu0 0
    %354 = vmatpush1.bf16.msra.mxu0 %v345
    %355 = vmatprep.subr.bf16.mxu0 0
    %356 = vmatpush1.bf16.msra.mxu0 0
    %357 = vmatprep.subr.bf16.mxu0 0
    %358 = vmatpush1.bf16.msra.mxu0 0
    %359 = vmatprep.subr.bf16.mxu0 0
    %360 = vmatpush1.bf16.msra.mxu0 0
    %361 = vmatprep.subr.bf16.mxu0 0
    %362 = vmatpush1.bf16.msra.mxu0 0
    %363 = vmatprep.subr.bf16.mxu0 0
    %364 = vmatpush1.bf16.msra.mxu0 0
    %365 = vmatprep.subr.bf16.mxu0 0
    %366 = vmatpush1.bf16.msra.mxu0 0
    %367 = vmatprep.subr.bf16.mxu0 0
    %368 = vmatpush1.bf16.msra.mxu0 0
    %369 = vmatprep.subr.bf16.mxu0 0
    %370 = vmatpush1.bf16.msra.mxu0 0
    %371 = vmatprep.subr.bf16.mxu0 0
    %372 = vmatpush1.bf16.msra.mxu0 0
    %373 = vmatprep.subr.bf16.mxu0 0
    %374 = vmatpush1.bf16.msra.mxu0 0
    %375 = vmatprep.subr.bf16.mxu0 0
    %376 = vmatpush1.bf16.msra.mxu0 0
    %377 = vmatprep.subr.bf16.mxu0 0
    %378 = vmatpush1.bf16.msra.mxu0 0
    %379 = vmatprep.subr.bf16.mxu0 0
    %380 = vmatpush1.bf16.msra.mxu0 0
    %381 = vmatprep.subr.bf16.mxu0 0
    %382 = vmatpush1.bf16.msra.mxu0 0
    %383 = vmatprep.mubr.bf16.mxu0 0
    %384 = vmatmul.mubr.bf16.gmra.mrb[0].mxu0 %v349
    %v385 = vpop.f32.mrb[0].mxu0
    %v386 = vadd.f32 %v334, %v385
    %v387 = vpop.f32.mrb[0].mxu0
    %v388 = vpop.f32.mrb[0].mxu0
    %v389 = vpop.f32.mrb[0].mxu0
    %390 = vdwg.mxu0
    %v391 = vmax.f32 %v386, 0.0
    %v392 = vpack.c.bf16 %v391, %v391
    %v393 = vld [vmem:[%s11] sm:$0xf]
    %v394 = vld [vmem:[%s11 + $0x4] sm:$0xf]
    %v395 = vld [vmem:[%s11 + $0x8] sm:$0xf]
    %v396 = vld [vmem:[%s11 + $0xc] sm:$0xf]
    %v397 = vld [vmem:[%s11 + $0x10] sm:$0xf]
    %v398 = vld [vmem:[%s11 + $0x14] sm:$0xf]
    %v399 = vld [vmem:[%s11 + $0x18] sm:$0xf]
    %v400 = vld [vmem:[%s11 + $0x1c] sm:$0xf]
    %v401 = vld [vmem:[%s11 + $0x20] sm:$0xf]
    %v402 = vld [vmem:[%s11 + $0x24] sm:$0xf]
    %v403 = vld [vmem:[%s11 + $0x28] sm:$0xf]
    %v404 = vld [vmem:[%s11 + $0x2c] sm:$0xf]
    %v405 = vld [vmem:[%s11 + $0x30] sm:$0xf]
    %v406 = vld [vmem:[%s11 + $0x34] sm:$0xf]
    %v407 = vld [vmem:[%s11 + $0x38] sm:$0xf]
    %v408 = vld [vmem:[%s11 + $0x3c] sm:$0xf]
    %v409 = vld [vmem:[%s12] sm:$0x1]
    %v411 = vlaneseq
    %v412 = vshrl.u32 %v411, 7
    %v413 = vsub.s32 0, %v412
    %v414 = vrot.slane %v409, %v413
    %v432 = vunpack.c.l.b16 %v393
    %v433 = vunpack.c.l.b16 %v394
    %v434 = vunpack.c.l.b16 %v395
    %v435 = vunpack.c.l.b16 %v396
    %v436 = vunpack.c.l.b16 %v397
    %v437 = vunpack.c.l.b16 %v398
    %v438 = vunpack.c.l.b16 %v399
    %v439 = vunpack.c.l.b16 %v400
    %v440 = vunpack.c.l.b16 %v401
    %v441 = vunpack.c.l.b16 %v402
    %v442 = vunpack.c.l.b16 %v403
    %v443 = vunpack.c.l.b16 %v404
    %v444 = vunpack.c.l.b16 %v405
    %v445 = vunpack.c.l.b16 %v406
    %v446 = vunpack.c.l.b16 %v407
    %v447 = vunpack.c.l.b16 %v408
    %v448 = vpack.c.b16 %v433, %v432
    %v449 = vpack.c.b16 %v435, %v434
    %v450 = vpack.c.b16 %v437, %v436
    %v451 = vpack.c.b16 %v439, %v438
    %v452 = vpack.c.b16 %v441, %v440
    %v453 = vpack.c.b16 %v443, %v442
    %v454 = vpack.c.b16 %v445, %v444
    %v455 = vpack.c.b16 %v447, %v446
    %464 = vmatprep.subr.bf16.mxu0 0
    %465 = vmatpush1.bf16.msra.mxu0 %v448
    %466 = vmatprep.subr.bf16.mxu0 0
    %467 = vmatpush1.bf16.msra.mxu0 %v449
    %468 = vmatprep.subr.bf16.mxu0 0
    %469 = vmatpush1.bf16.msra.mxu0 %v450
    %470 = vmatprep.subr.bf16.mxu0 0
    %471 = vmatpush1.bf16.msra.mxu0 %v451
    %472 = vmatprep.subr.bf16.mxu0 0
    %473 = vmatpush1.bf16.msra.mxu0 %v452
    %474 = vmatprep.subr.bf16.mxu0 0
    %475 = vmatpush1.bf16.msra.mxu0 %v453
    %476 = vmatprep.subr.bf16.mxu0 0
    %477 = vmatpush1.bf16.msra.mxu0 %v454
    %478 = vmatprep.subr.bf16.mxu0 0
    %479 = vmatpush1.bf16.msra.mxu0 %v455
    %480 = vmatprep.subr.bf16.mxu0 0
    %481 = vmatpush1.bf16.msra.mxu0 0
    %482 = vmatprep.subr.bf16.mxu0 0
    %483 = vmatpush1.bf16.msra.mxu0 0
    %484 = vmatprep.subr.bf16.mxu0 0
    %485 = vmatpush1.bf16.msra.mxu0 0
    %486 = vmatprep.subr.bf16.mxu0 0
    %487 = vmatpush1.bf16.msra.mxu0 0
    %488 = vmatprep.subr.bf16.mxu0 0
    %489 = vmatpush1.bf16.msra.mxu0 0
    %490 = vmatprep.subr.bf16.mxu0 0
    %491 = vmatpush1.bf16.msra.mxu0 0
    %492 = vmatprep.subr.bf16.mxu0 0
    %493 = vmatpush1.bf16.msra.mxu0 0
    %494 = vmatprep.subr.bf16.mxu0 0
    %495 = vmatpush1.bf16.msra.mxu0 0
    %496 = vmatprep.mubr.bf16.mxu0 0
    %497 = vmatmul.mubr.bf16.gmra.mrb[0].mxu0 %v392
    %v498 = vpop.f32.mrb[0].mxu0
    %v499 = vadd.f32 %v414, %v498
    %v500 = vpop.f32.mrb[0].mxu0
    %v501 = vpop.f32.mrb[0].mxu0
    %v502 = vpop.f32.mrb[0].mxu0
    %503 = vdwg.mxu0
    %v504 = vmax.f32 %v499, 0.0
    %v505 = vpack.c.bf16 %v504, %v504
    %v506 = vld [vmem:[%s13] sm:$0xf]
    %v507 = vld [vmem:[%s13 + $0x4] sm:$0xf]
    %v508 = vld [vmem:[%s13 + $0x8] sm:$0xf]
    %v509 = vld [vmem:[%s13 + $0xc] sm:$0xf]
    %v510 = vld [vmem:[%s14] sm:$0x1]
    %v512 = vlaneseq
    %v513 = vshrl.u32 %v512, 7
    %v514 = vsub.s32 0, %v513
    %v515 = vrot.slane %v510, %v514
    %v521 = vunpack.c.l.b16 %v506
    %v522 = vunpack.c.l.b16 %v507
    %v523 = vunpack.c.l.b16 %v508
    %v524 = vunpack.c.l.b16 %v509
    %v525 = vpack.c.b16 %v522, %v521
    %v526 = vpack.c.b16 %v524, %v523
    %v530 = vsel %vm143, %v505, 0
    %532 = vmatprep.subr.bf16.mxu0 0
    %533 = vmatpush1.bf16.msra.mxu0 %v525
    %534 = vmatprep.subr.bf16.mxu0 0
    %535 = vmatpush1.bf16.msra.mxu0 %v526
    %536 = vmatprep.subr.bf16.mxu0 0
    %537 = vmatpush1.bf16.msra.mxu0 0
    %538 = vmatprep.subr.bf16.mxu0 0
    %539 = vmatpush1.bf16.msra.mxu0 0
    %540 = vmatprep.subr.bf16.mxu0 0
    %541 = vmatpush1.bf16.msra.mxu0 0
    %542 = vmatprep.subr.bf16.mxu0 0
    %543 = vmatpush1.bf16.msra.mxu0 0
    %544 = vmatprep.subr.bf16.mxu0 0
    %545 = vmatpush1.bf16.msra.mxu0 0
    %546 = vmatprep.subr.bf16.mxu0 0
    %547 = vmatpush1.bf16.msra.mxu0 0
    %548 = vmatprep.subr.bf16.mxu0 0
    %549 = vmatpush1.bf16.msra.mxu0 0
    %550 = vmatprep.subr.bf16.mxu0 0
    %551 = vmatpush1.bf16.msra.mxu0 0
    %552 = vmatprep.subr.bf16.mxu0 0
    %553 = vmatpush1.bf16.msra.mxu0 0
    %554 = vmatprep.subr.bf16.mxu0 0
    %555 = vmatpush1.bf16.msra.mxu0 0
    %556 = vmatprep.subr.bf16.mxu0 0
    %557 = vmatpush1.bf16.msra.mxu0 0
    %558 = vmatprep.subr.bf16.mxu0 0
    %559 = vmatpush1.bf16.msra.mxu0 0
    %560 = vmatprep.subr.bf16.mxu0 0
    %561 = vmatpush1.bf16.msra.mxu0 0
    %562 = vmatprep.subr.bf16.mxu0 0
    %563 = vmatpush1.bf16.msra.mxu0 0
    %564 = vmatprep.mubr.bf16.mxu0 0
    %565 = vmatmul.mubr.bf16.gmra.mrb[0].mxu0 %v530
    %v566 = vpop.f32.mrb[0].mxu0
    %v567 = vadd.f32 %v515, %v566
    %v568 = vpop.f32.mrb[0].mxu0
    %v569 = vpop.f32.mrb[0].mxu0
    %v570 = vpop.f32.mrb[0].mxu0
    %571 = vdwg.mxu0
    %v572 = vld [vmem:[%s15] sm:$0xf]
    %v573 = vld [vmem:[%s15 + $0x4] sm:$0xf]
    %v574 = vld [vmem:[%s15 + $0x8] sm:$0xf]
    %v575 = vld [vmem:[%s15 + $0xc] sm:$0xf]
    %v576 = vld [vmem:[%s16] sm:$0x1]
    %v578 = vlaneseq
    %v579 = vshrl.u32 %v578, 7
    %v580 = vsub.s32 0, %v579
    %v581 = vrot.slane %v576, %v580
    %v587 = vunpack.c.l.b16 %v572
    %v588 = vunpack.c.l.b16 %v573
    %v589 = vunpack.c.l.b16 %v574
    %v590 = vunpack.c.l.b16 %v575
    %v591 = vpack.c.b16 %v588, %v587
    %v592 = vpack.c.b16 %v590, %v589
    %595 = vmatprep.subr.bf16.mxu0 0
    %596 = vmatpush1.bf16.msra.mxu0 %v591
    %597 = vmatprep.subr.bf16.mxu0 0
    %598 = vmatpush1.bf16.msra.mxu0 %v592
    %599 = vmatprep.subr.bf16.mxu0 0
    %600 = vmatpush1.bf16.msra.mxu0 0
    %601 = vmatprep.subr.bf16.mxu0 0
    %602 = vmatpush1.bf16.msra.mxu0 0
    %603 = vmatprep.subr.bf16.mxu0 0
    %604 = vmatpush1.bf16.msra.mxu0 0
    %605 = vmatprep.subr.bf16.mxu0 0
    %606 = vmatpush1.bf16.msra.mxu0 0
    %607 = vmatprep.subr.bf16.mxu0 0
    %608 = vmatpush1.bf16.msra.mxu0 0
    %609 = vmatprep.subr.bf16.mxu0 0
    %610 = vmatpush1.bf16.msra.mxu0 0
    %611 = vmatprep.subr.bf16.mxu0 0
    %612 = vmatpush1.bf16.msra.mxu0 0
    %613 = vmatprep.subr.bf16.mxu0 0
    %614 = vmatpush1.bf16.msra.mxu0 0
    %615 = vmatprep.subr.bf16.mxu0 0
    %616 = vmatpush1.bf16.msra.mxu0 0
    %617 = vmatprep.subr.bf16.mxu0 0
    %618 = vmatpush1.bf16.msra.mxu0 0
    %619 = vmatprep.subr.bf16.mxu0 0
    %620 = vmatpush1.bf16.msra.mxu0 0
    %621 = vmatprep.subr.bf16.mxu0 0
    %622 = vmatpush1.bf16.msra.mxu0 0
    %623 = vmatprep.subr.bf16.mxu0 0
    %624 = vmatpush1.bf16.msra.mxu0 0
    %625 = vmatprep.subr.bf16.mxu0 0
    %626 = vmatpush1.bf16.msra.mxu0 0
    %627 = vmatprep.mubr.bf16.mxu0 0
    %628 = vmatmul.mubr.bf16.gmra.mrb[0].mxu0 %v349
    %v629 = vpop.f32.mrb[0].mxu0
    %v630 = vadd.f32 %v581, %v629
    %v631 = vpop.f32.mrb[0].mxu0
    %v632 = vpop.f32.mrb[0].mxu0
    %v633 = vpop.f32.mrb[0].mxu0
    %634 = vdwg.mxu0
    %636 = vrot.lane.b32.xlu0 %v630, 16
    %v637 = vpop.permute.xlu0 %636
    %v639 = vsel %vm74, %v567, %v637
    %vm640 = vcmask 195584
    %641 = vst.msk [vmem:[#allocation2] sm:$0xff] %vm640, %v639
    // Predicated region
    $region70: #{tpu_custom_call.1} parent=1 // pred_check
      _
    $region71: #{tpu_custom_call.1} parent=1 // pred_check_branch
      %643 = sbr.rel (0) target = $region73
    $region72: #{tpu_custom_call.1} parent=1 // pred_region
      %s645 = ssub.s32 128, 128
      %646 = vsyncadd [#allocation3], %s645
      %s648 = sshll.u32 [#allocation2], 4
      %s649 = int_to_ptr.vmem [resolvable:$true] %s648
      %651 = dma.vmem_to_hbm [thread:$0]  %s649, 128, %s17, [#allocation3]
    $region73: #{tpu_custom_call.1} parent=1 // pred_fallthru
      _
    // Predicated region
    $region74: #{tpu_custom_call.1} parent=1 // pred_check
      _
    $region75: #{tpu_custom_call.1} parent=1 // pred_check_branch
      %653 = sbr.rel (0) target = $region77
    $region76: #{tpu_custom_call.1} parent=1 // pred_region
      %654 = dma.done [#allocation3], 128
    $region77: #{tpu_custom_call.1} parent=1 // pred_fallthru
      _
    %655 = vsyncpa [#allocation3], 1

</llo_original>
